<compile_context>
chip_gen: v7x
topology: tpu7x:2x2x1
jax: 0.10.0
libtpu: 0.0.40
codegen_flags: <defaults>
</compile_context>

<pallas_src>
import functools

import jax
import jax.numpy as jnp
from jax.experimental import pallas as pl
from jax.experimental.pallas import tpu as pltpu


def _align8(n):
    return ((n + 7) // 8) * 8


def _param_offsets(input_dim, hidden_dim, lane_w):
    """Static, 8-aligned row offsets of each section in the packed buffer."""
    offs, r = {}, 0
    offs["wih"] = r; r = _align8(r + input_dim)     # (input_dim, 4H)
    offs["whh"] = r; r = _align8(r + hidden_dim)    # (H, 4H)
    offs["b"]   = r; r = _align8(r + 1)             # (1, 4H)    b_ih + b_hh
    offs["w1"]  = r; r = _align8(r + hidden_dim)    # (H, H)  -> lane-padded
    offs["b1"]  = r; r = _align8(r + 1)             # (1, H)  -> lane-padded
    offs["we"]  = r; r = _align8(r + lane_w)        # (H, out) -> row+lane padded
    offs["be"]  = r; r = _align8(r + 1)             # (1, out) -> lane-padded
    offs["rows"] = r
    return offs


def _encoder_kernel(seq, batch, input_dim, hidden_dim, lane_w, offs,
                    x_ref, hc0_ref, p_ref, out_ref):
    H, B = hidden_dim, batch
    SB = seq * batch

    # ---- unpack the single packed parameter buffer (static row slices) ----
    wih = p_ref[offs["wih"]:offs["wih"] + input_dim, :]   # (I,  lane_w)
    whh = p_ref[offs["whh"]:offs["whh"] + H, :]           # (H,  lane_w)
    b   = p_ref[offs["b"]:offs["b"] + 1, :]               # (1,  lane_w)
    w1  = p_ref[offs["w1"]:offs["w1"] + H, :]              # (H,  lane_w) pad=0
    b1  = p_ref[offs["b1"]:offs["b1"] + 1, :]              # (1,  lane_w) pad=0
    we  = p_ref[offs["we"]:offs["we"] + lane_w, :]         # (lw, lane_w) pad=0
    be  = p_ref[offs["be"]:offs["be"] + 1, :]              # (1,  lane_w) pad=0

    h = hc0_ref[0:B, :]                                    # (B, H)
    c = hc0_ref[B:2 * B, :]                                # (B, H)

    # Batched input projection for all time steps (bias folded in once).
    gates_x = jnp.dot(x_ref[...], wih,
                      preferred_element_type=jnp.float32) + b   # (SB, lane_w)

    # Sequential LSTM recurrence, fully unrolled (seq is small & static).
    z_steps = []
    for t in range(seq):
        gates = (gates_x[t * B:(t + 1) * B, :]
                 + jnp.dot(h, whh, preferred_element_type=jnp.float32))
        sig = jax.nn.sigmoid(gates)        # one EUP pass over full 4H
        tan = jnp.tanh(gates)              # one EUP pass over full 4H
        i_g = sig[:, 0 * H:1 * H]
        f_g = sig[:, 1 * H:2 * H]
        o_g = sig[:, 3 * H:4 * H]
        g_g = tan[:, 2 * H:3 * H]
        c = f_g * c + i_g * g_g
        h = o_g * jnp.tanh(c)
        # fc1 + ReLU on the live h: independent MXU work hidden under the
        # serial EUP/VPU chain; zero-padded lanes stay exactly zero.
        z_steps.append(jnp.maximum(
            jnp.dot(h, w1, preferred_element_type=jnp.float32) + b1, 0.0))

    # Epilogue: one batched embedding matmul + one lane-dense store.
    z_all = jnp.concatenate(z_steps, axis=0) if seq > 1 else z_steps[0]
    emb = jnp.dot(z_all, we, preferred_element_type=jnp.float32) + be
    out_ref[0:SB, :] = emb.astype(out_ref.dtype)

    # Final hidden/cell state, lane-padded to a lane-dense block.
    hc = jnp.concatenate([h, c], axis=0)                        # (2B, H)
    hc = jnp.concatenate(
        [hc, jnp.zeros((2 * B, lane_w - H), jnp.float32)], axis=1)
    out_ref[SB:SB + 2 * B, :] = hc.astype(out_ref.dtype)


@functools.partial(jax.jit, static_argnames=("output_dim",))
def encoder_forward(x, hidden, packed_params, *, output_dim):
    """Pallas Encoder forward.

    x:             (seq, batch, input_dim) or (batch, input_dim)
    hidden:        (h0, c0), each (1, batch, hidden_dim)
    packed_params: buffer produced by `pack_params`
    returns (embedding (seq, batch, output_dim), (h_n, c_n))
    """
    if x.ndim == 2:                      # matches `x.unsqueeze(0)` in PyTorch
        x = x[None]
    h0, c0 = hidden
    h0, c0 = h0[0], c0[0]

    seq, batch, input_dim = x.shape
    hidden_dim = h0.shape[-1]
    lane_w = max(4 * hidden_dim, 128)
    offs = _param_offsets(input_dim, hidden_dim, lane_w)
    SB = seq * batch

    x2d = x.reshape(SB, input_dim)                     # free reshape outside
    hc0 = jnp.concatenate([h0, c0], axis=0)            # (2*batch, H), one DMA

    kernel = functools.partial(_encoder_kernel, seq, batch, input_dim,
                               hidden_dim, lane_w, offs)
    vmem = pl.BlockSpec(memory_space=pltpu.MemorySpace.VMEM)

    # Single gridless invocation, single TC.
    # TODO(synk): on v7x the second TensorCore stays idle; batching multiple
    # sequences into one call is the intended way to fill the chip.
    out = pl.pallas_call(
        kernel,
        out_shape=jax.ShapeDtypeStruct((SB + 2 * batch, lane_w), jnp.float32),
        in_specs=[vmem, vmem, vmem],
        out_specs=vmem,
    )(x2d, hc0, packed_params)

    emb = out[0:SB, 0:output_dim].reshape(seq, batch, output_dim)
    h_n = out[SB:SB + batch, 0:hidden_dim]
    c_n = out[SB + batch:SB + 2 * batch, 0:hidden_dim]
    return emb, (h_n[None], c_n[None])


def make_params(key, input_dim, hidden_dim, output_dim):
    """Deterministic parameter init (PyTorch-style uniform ranges)."""
    ks = jax.random.split(key, 8)
    s = 1.0 / jnp.sqrt(hidden_dim)
    u = lambda k, shape: jax.random.uniform(k, shape, jnp.float32, -s, s)
    w_ih = u(ks[0], (4 * hidden_dim, input_dim))
    w_hh = u(ks[1], (4 * hidden_dim, hidden_dim))
    b_ih = u(ks[2], (4 * hidden_dim,))
    b_hh = u(ks[3], (4 * hidden_dim,))
    w1 = u(ks[4], (hidden_dim, hidden_dim))
    b1 = u(ks[5], (hidden_dim,))
    we = u(ks[6], (output_dim, hidden_dim))
    be = u(ks[7], (output_dim,))
    return {
        "wih_T": w_ih.T,                       # (input_dim, 4H)
        "whh_T": w_hh.T,                       # (H, 4H)
        "b_lstm": (b_ih + b_hh)[None, :],      # (1, 4H)
        "w1_T": w1.T,                          # (H, H)
        "b1": b1[None, :],                     # (1, H)
        "we_T": we.T,                          # (H, out)
        "be": be[None, :],                     # (1, out)
    }


def pack_params(p, input_dim, hidden_dim, output_dim):
    """Pack all parameters into one lane-dense (rows, lane_w) f32 buffer."""
    lane_w = max(4 * hidden_dim, 128)
    offs = _param_offsets(input_dim, hidden_dim, lane_w)
    G = 4 * hidden_dim
    buf = jnp.zeros((offs["rows"], lane_w), jnp.float32)
    buf = buf.at[offs["wih"]:offs["wih"] + input_dim, :G].set(p["wih_T"])
    buf = buf.at[offs["whh"]:offs["whh"] + hidden_dim, :G].set(p["whh_T"])
    buf = buf.at[offs["b"], :G].set(p["b_lstm"][0])
    buf = buf.at[offs["w1"]:offs["w1"] + hidden_dim, :hidden_dim].set(p["w1_T"])
    buf = buf.at[offs["b1"], :hidden_dim].set(p["b1"][0])
    buf = buf.at[offs["we"]:offs["we"] + hidden_dim, :output_dim].set(p["we_T"])
    buf = buf.at[offs["be"], :output_dim].set(p["be"][0])
    return buf


def encoder_ref(x, hidden, p):
    """Pure-JAX reference for correctness checking."""
    if x.ndim == 2:
        x = x[None]
    h0, c0 = hidden[0][0], hidden[1][0]

    def step(carry, xt):
        h, c = carry
        gates = xt @ p["wih_T"] + h @ p["whh_T"] + p["b_lstm"]
        i, f, g, o = jnp.split(gates, 4, axis=-1)
        i, f, o = jax.nn.sigmoid(i), jax.nn.sigmoid(f), jax.nn.sigmoid(o)
        g = jnp.tanh(g)
        c = f * c + i * g
        h = o * jnp.tanh(c)
        return (h, c), h

    (h_n, c_n), hs = jax.lax.scan(step, (h0, c0), x)
    z = jnp.maximum(hs @ p["w1_T"] + p["b1"], 0.0)
    emb = z @ p["we_T"] + p["be"]
    return emb, (h_n[None], c_n[None])


if __name__ == "__main__":
    seq, batch = 8, 2
    input_dim, hidden_dim, output_dim = 16, 32, 8

    key = jax.random.PRNGKey(0)
    k_x, k_h, k_c, k_p = jax.random.split(key, 4)

    x = jax.random.normal(k_x, (seq, batch, input_dim), jnp.float32)
    h0 = jax.random.normal(k_h, (1, batch, hidden_dim), jnp.float32)
    c0 = jax.random.normal(k_c, (1, batch, hidden_dim), jnp.float32)
    params = make_params(k_p, input_dim, hidden_dim, output_dim)
    packed = pack_params(params, input_dim, hidden_dim, output_dim)

    emb, (h_n, c_n) = encoder_forward(x, (h0, c0), packed,
                                      output_dim=output_dim)
    jax.block_until_ready((emb, h_n, c_n))

    emb_r, (h_r, c_r) = encoder_ref(x, (h0, c0), params)
    assert emb.shape == (seq, batch, output_dim)
    assert h_n.shape == (1, batch, hidden_dim)
    assert c_n.shape == (1, batch, hidden_dim)
    assert jnp.allclose(emb, emb_r, atol=1e-5, rtol=1e-5)
    assert jnp.allclose(h_n, h_r, atol=1e-5, rtol=1e-5)
    assert jnp.allclose(c_n, c_r, atol=1e-5, rtol=1e-5)

    # 2-D input path (matches the x.unsqueeze(0) branch of the PyTorch module).
    emb2, (h_n2, c_n2) = encoder_forward(x[0], (h0, c0), packed,
                                         output_dim=output_dim)
    jax.block_until_ready((emb2, h_n2, c_n2))
    emb2_r, (h2_r, c2_r) = encoder_ref(x[0], (h0, c0), params)
    assert emb2.shape == (1, batch, output_dim)
    assert jnp.allclose(emb2, emb2_r, atol=1e-5, rtol=1e-5)
    assert jnp.allclose(h_n2, h2_r, atol=1e-5, rtol=1e-5)
    assert jnp.allclose(c_n2, c2_r, atol=1e-5, rtol=1e-5)

    print("KERNEL_OK")
</pallas_src>

<mosaic_0001>
module attributes {stable_mosaic.version = 11 : i64} {
  func.func @_encoder_kernel(%arg0: memref<16x16xf32, #tpu.memory_space<vmem>>, %arg1: memref<4x32xf32, #tpu.memory_space<vmem>>, %arg2: memref<232x128xf32, #tpu.memory_space<vmem>>, %arg3: memref<20x128xf32, #tpu.memory_space<vmem>>) attributes {dimension_semantics = [], scalar_prefetch = 0 : i64, scratch_operands = 0 : i64, tpu.core_type = #tpu.core_type<tc>} {
    %c0 = arith.constant 0 : index
    %c0_0 = arith.constant 0 : index
    %0 = vector.load %arg2[%c0, %c0_0] : memref<232x128xf32, #tpu.memory_space<vmem>>, vector<16x128xf32>
    %c16 = arith.constant 16 : index
    %c0_1 = arith.constant 0 : index
    %1 = vector.load %arg2[%c16, %c0_1] : memref<232x128xf32, #tpu.memory_space<vmem>>, vector<32x128xf32>
    %c48 = arith.constant 48 : index
    %c0_2 = arith.constant 0 : index
    %2 = vector.load %arg2[%c48, %c0_2] : memref<232x128xf32, #tpu.memory_space<vmem>>, vector<1x128xf32>
    %c56 = arith.constant 56 : index
    %c0_3 = arith.constant 0 : index
    %3 = vector.load %arg2[%c56, %c0_3] : memref<232x128xf32, #tpu.memory_space<vmem>>, vector<32x128xf32>
    %c88 = arith.constant 88 : index
    %c0_4 = arith.constant 0 : index
    %4 = vector.load %arg2[%c88, %c0_4] : memref<232x128xf32, #tpu.memory_space<vmem>>, vector<1x128xf32>
    %c96 = arith.constant 96 : index
    %c0_5 = arith.constant 0 : index
    %5 = vector.load %arg2[%c96, %c0_5] : memref<232x128xf32, #tpu.memory_space<vmem>>, vector<128x128xf32>
    %c224 = arith.constant 224 : index
    %c0_6 = arith.constant 0 : index
    %6 = vector.load %arg2[%c224, %c0_6] : memref<232x128xf32, #tpu.memory_space<vmem>>, vector<1x128xf32>
    %c0_7 = arith.constant 0 : index
    %c0_8 = arith.constant 0 : index
    %7 = vector.load %arg1[%c0_7, %c0_8] : memref<4x32xf32, #tpu.memory_space<vmem>>, vector<2x32xf32>
    %c2 = arith.constant 2 : index
    %c0_9 = arith.constant 0 : index
    %8 = vector.load %arg1[%c2, %c0_9] : memref<4x32xf32, #tpu.memory_space<vmem>>, vector<2x32xf32>
    %c0_10 = arith.constant 0 : index
    %c0_11 = arith.constant 0 : index
    %9 = vector.load %arg0[%c0_10, %c0_11] : memref<16x16xf32, #tpu.memory_space<vmem>>, vector<16x16xf32>
    %cst = arith.constant dense<0.000000e+00> : vector<16x128xf32>
    %10 = tpu.matmul %9, %0, %cst {dimension_numbers = #tpu.dot_dimension_numbers<[1], [0], [0], [1], [0, 0, 1, 1], [], []>} : vector<16x16xf32>, vector<16x128xf32>, vector<16x128xf32> -> vector<16x128xf32>
    %11 = vector.broadcast %2 : vector<1x128xf32> to vector<16x128xf32>
    %12 = arith.addf %10, %11 : vector<16x128xf32>
    %13 = vector.extract_strided_slice %12 {offsets = [0, 0], sizes = [2, 128], strides = [1, 1]} : vector<16x128xf32> to vector<2x128xf32>
    %cst_12 = arith.constant dense<0.000000e+00> : vector<2x128xf32>
    %14 = tpu.matmul %7, %1, %cst_12 {dimension_numbers = #tpu.dot_dimension_numbers<[1], [0], [0], [1], [0, 0, 1, 1], [], []>} : vector<2x32xf32>, vector<32x128xf32>, vector<2x128xf32> -> vector<2x128xf32>
    %15 = arith.addf %13, %14 : vector<2x128xf32>
    %16 = arith.negf %15 : vector<2x128xf32>
    %17 = math.exp %16 : vector<2x128xf32>
    %cst_13 = arith.constant 1.000000e+00 : f32
    %18 = vector.broadcast %cst_13 : f32 to vector<2x128xf32>
    %19 = arith.addf %18, %17 : vector<2x128xf32>
    %20 = arith.divf %18, %19 : vector<2x128xf32>
    %21 = math.tanh %15 : vector<2x128xf32>
    %22 = vector.extract_strided_slice %20 {offsets = [0, 0], sizes = [2, 32], strides = [1, 1]} : vector<2x128xf32> to vector<2x32xf32>
    %23 = vector.extract_strided_slice %20 {offsets = [0, 32], sizes = [2, 32], strides = [1, 1]} : vector<2x128xf32> to vector<2x32xf32>
    %24 = vector.extract_strided_slice %20 {offsets = [0, 96], sizes = [2, 32], strides = [1, 1]} : vector<2x128xf32> to vector<2x32xf32>
    %25 = vector.extract_strided_slice %21 {offsets = [0, 64], sizes = [2, 32], strides = [1, 1]} : vector<2x128xf32> to vector<2x32xf32>
    %26 = arith.mulf %23, %8 : vector<2x32xf32>
    %27 = arith.mulf %22, %25 : vector<2x32xf32>
    %28 = arith.addf %26, %27 : vector<2x32xf32>
    %29 = math.tanh %28 : vector<2x32xf32>
    %30 = arith.mulf %24, %29 : vector<2x32xf32>
    %cst_14 = arith.constant dense<0.000000e+00> : vector<2x128xf32>
    %31 = tpu.matmul %30, %3, %cst_14 {dimension_numbers = #tpu.dot_dimension_numbers<[1], [0], [0], [1], [0, 0, 1, 1], [], []>} : vector<2x32xf32>, vector<32x128xf32>, vector<2x128xf32> -> vector<2x128xf32>
    %32 = vector.broadcast %4 : vector<1x128xf32> to vector<2x128xf32>
    %33 = arith.addf %31, %32 : vector<2x128xf32>
    %cst_15 = arith.constant 0.000000e+00 : f32
    %34 = vector.broadcast %cst_15 : f32 to vector<2x128xf32>
    %35 = arith.maximumf %33, %34 : vector<2x128xf32>
    %36 = vector.extract_strided_slice %12 {offsets = [2, 0], sizes = [2, 128], strides = [1, 1]} : vector<16x128xf32> to vector<2x128xf32>
    %cst_16 = arith.constant dense<0.000000e+00> : vector<2x128xf32>
    %37 = tpu.matmul %30, %1, %cst_16 {dimension_numbers = #tpu.dot_dimension_numbers<[1], [0], [0], [1], [0, 0, 1, 1], [], []>} : vector<2x32xf32>, vector<32x128xf32>, vector<2x128xf32> -> vector<2x128xf32>
    %38 = arith.addf %36, %37 : vector<2x128xf32>
    %39 = arith.negf %38 : vector<2x128xf32>
    %40 = math.exp %39 : vector<2x128xf32>
    %cst_17 = arith.constant 1.000000e+00 : f32
    %41 = vector.broadcast %cst_17 : f32 to vector<2x128xf32>
    %42 = arith.addf %41, %40 : vector<2x128xf32>
    %43 = arith.divf %41, %42 : vector<2x128xf32>
    %44 = math.tanh %38 : vector<2x128xf32>
    %45 = vector.extract_strided_slice %43 {offsets = [0, 0], sizes = [2, 32], strides = [1, 1]} : vector<2x128xf32> to vector<2x32xf32>
    %46 = vector.extract_strided_slice %43 {offsets = [0, 32], sizes = [2, 32], strides = [1, 1]} : vector<2x128xf32> to vector<2x32xf32>
    %47 = vector.extract_strided_slice %43 {offsets = [0, 96], sizes = [2, 32], strides = [1, 1]} : vector<2x128xf32> to vector<2x32xf32>
    %48 = vector.extract_strided_slice %44 {offsets = [0, 64], sizes = [2, 32], strides = [1, 1]} : vector<2x128xf32> to vector<2x32xf32>
    %49 = arith.mulf %46, %28 : vector<2x32xf32>
    %50 = arith.mulf %45, %48 : vector<2x32xf32>
    %51 = arith.addf %49, %50 : vector<2x32xf32>
    %52 = math.tanh %51 : vector<2x32xf32>
    %53 = arith.mulf %47, %52 : vector<2x32xf32>
    %cst_18 = arith.constant dense<0.000000e+00> : vector<2x128xf32>
    %54 = tpu.matmul %53, %3, %cst_18 {dimension_numbers = #tpu.dot_dimension_numbers<[1], [0], [0], [1], [0, 0, 1, 1], [], []>} : vector<2x32xf32>, vector<32x128xf32>, vector<2x128xf32> -> vector<2x128xf32>
    %55 = vector.broadcast %4 : vector<1x128xf32> to vector<2x128xf32>
    %56 = arith.addf %54, %55 : vector<2x128xf32>
    %cst_19 = arith.constant 0.000000e+00 : f32
    %57 = vector.broadcast %cst_19 : f32 to vector<2x128xf32>
    %58 = arith.maximumf %56, %57 : vector<2x128xf32>
    %59 = vector.extract_strided_slice %12 {offsets = [4, 0], sizes = [2, 128], strides = [1, 1]} : vector<16x128xf32> to vector<2x128xf32>
    %cst_20 = arith.constant dense<0.000000e+00> : vector<2x128xf32>
    %60 = tpu.matmul %53, %1, %cst_20 {dimension_numbers = #tpu.dot_dimension_numbers<[1], [0], [0], [1], [0, 0, 1, 1], [], []>} : vector<2x32xf32>, vector<32x128xf32>, vector<2x128xf32> -> vector<2x128xf32>
    %61 = arith.addf %59, %60 : vector<2x128xf32>
    %62 = arith.negf %61 : vector<2x128xf32>
    %63 = math.exp %62 : vector<2x128xf32>
    %cst_21 = arith.constant 1.000000e+00 : f32
    %64 = vector.broadcast %cst_21 : f32 to vector<2x128xf32>
    %65 = arith.addf %64, %63 : vector<2x128xf32>
    %66 = arith.divf %64, %65 : vector<2x128xf32>
    %67 = math.tanh %61 : vector<2x128xf32>
    %68 = vector.extract_strided_slice %66 {offsets = [0, 0], sizes = [2, 32], strides = [1, 1]} : vector<2x128xf32> to vector<2x32xf32>
    %69 = vector.extract_strided_slice %66 {offsets = [0, 32], sizes = [2, 32], strides = [1, 1]} : vector<2x128xf32> to vector<2x32xf32>
    %70 = vector.extract_strided_slice %66 {offsets = [0, 96], sizes = [2, 32], strides = [1, 1]} : vector<2x128xf32> to vector<2x32xf32>
    %71 = vector.extract_strided_slice %67 {offsets = [0, 64], sizes = [2, 32], strides = [1, 1]} : vector<2x128xf32> to vector<2x32xf32>
    %72 = arith.mulf %69, %51 : vector<2x32xf32>
    %73 = arith.mulf %68, %71 : vector<2x32xf32>
    %74 = arith.addf %72, %73 : vector<2x32xf32>
    %75 = math.tanh %74 : vector<2x32xf32>
    %76 = arith.mulf %70, %75 : vector<2x32xf32>
    %cst_22 = arith.constant dense<0.000000e+00> : vector<2x128xf32>
    %77 = tpu.matmul %76, %3, %cst_22 {dimension_numbers = #tpu.dot_dimension_numbers<[1], [0], [0], [1], [0, 0, 1, 1], [], []>} : vector<2x32xf32>, vector<32x128xf32>, vector<2x128xf32> -> vector<2x128xf32>
    %78 = vector.broadcast %4 : vector<1x128xf32> to vector<2x128xf32>
    %79 = arith.addf %77, %78 : vector<2x128xf32>
    %cst_23 = arith.constant 0.000000e+00 : f32
    %80 = vector.broadcast %cst_23 : f32 to vector<2x128xf32>
    %81 = arith.maximumf %79, %80 : vector<2x128xf32>
    %82 = vector.extract_strided_slice %12 {offsets = [6, 0], sizes = [2, 128], strides = [1, 1]} : vector<16x128xf32> to vector<2x128xf32>
    %cst_24 = arith.constant dense<0.000000e+00> : vector<2x128xf32>
    %83 = tpu.matmul %76, %1, %cst_24 {dimension_numbers = #tpu.dot_dimension_numbers<[1], [0], [0], [1], [0, 0, 1, 1], [], []>} : vector<2x32xf32>, vector<32x128xf32>, vector<2x128xf32> -> vector<2x128xf32>
    %84 = arith.addf %82, %83 : vector<2x128xf32>
    %85 = arith.negf %84 : vector<2x128xf32>
    %86 = math.exp %85 : vector<2x128xf32>
    %cst_25 = arith.constant 1.000000e+00 : f32
    %87 = vector.broadcast %cst_25 : f32 to vector<2x128xf32>
    %88 = arith.addf %87, %86 : vector<2x128xf32>
    %89 = arith.divf %87, %88 : vector<2x128xf32>
    %90 = math.tanh %84 : vector<2x128xf32>
    %91 = vector.extract_strided_slice %89 {offsets = [0, 0], sizes = [2, 32], strides = [1, 1]} : vector<2x128xf32> to vector<2x32xf32>
    %92 = vector.extract_strided_slice %89 {offsets = [0, 32], sizes = [2, 32], strides = [1, 1]} : vector<2x128xf32> to vector<2x32xf32>
    %93 = vector.extract_strided_slice %89 {offsets = [0, 96], sizes = [2, 32], strides = [1, 1]} : vector<2x128xf32> to vector<2x32xf32>
    %94 = vector.extract_strided_slice %90 {offsets = [0, 64], sizes = [2, 32], strides = [1, 1]} : vector<2x128xf32> to vector<2x32xf32>
    %95 = arith.mulf %92, %74 : vector<2x32xf32>
    %96 = arith.mulf %91, %94 : vector<2x32xf32>
    %97 = arith.addf %95, %96 : vector<2x32xf32>
    %98 = math.tanh %97 : vector<2x32xf32>
    %99 = arith.mulf %93, %98 : vector<2x32xf32>
    %cst_26 = arith.constant dense<0.000000e+00> : vector<2x128xf32>
    %100 = tpu.matmul %99, %3, %cst_26 {dimension_numbers = #tpu.dot_dimension_numbers<[1], [0], [0], [1], [0, 0, 1, 1], [], []>} : vector<2x32xf32>, vector<32x128xf32>, vector<2x128xf32> -> vector<2x128xf32>
    %101 = vector.broadcast %4 : vector<1x128xf32> to vector<2x128xf32>
    %102 = arith.addf %100, %101 : vector<2x128xf32>
    %cst_27 = arith.constant 0.000000e+00 : f32
    %103 = vector.broadcast %cst_27 : f32 to vector<2x128xf32>
    %104 = arith.maximumf %102, %103 : vector<2x128xf32>
    %105 = vector.extract_strided_slice %12 {offsets = [8, 0], sizes = [2, 128], strides = [1, 1]} : vector<16x128xf32> to vector<2x128xf32>
    %cst_28 = arith.constant dense<0.000000e+00> : vector<2x128xf32>
    %106 = tpu.matmul %99, %1, %cst_28 {dimension_numbers = #tpu.dot_dimension_numbers<[1], [0], [0], [1], [0, 0, 1, 1], [], []>} : vector<2x32xf32>, vector<32x128xf32>, vector<2x128xf32> -> vector<2x128xf32>
    %107 = arith.addf %105, %106 : vector<2x128xf32>
    %108 = arith.negf %107 : vector<2x128xf32>
    %109 = math.exp %108 : vector<2x128xf32>
    %cst_29 = arith.constant 1.000000e+00 : f32
    %110 = vector.broadcast %cst_29 : f32 to vector<2x128xf32>
    %111 = arith.addf %110, %109 : vector<2x128xf32>
    %112 = arith.divf %110, %111 : vector<2x128xf32>
    %113 = math.tanh %107 : vector<2x128xf32>
    %114 = vector.extract_strided_slice %112 {offsets = [0, 0], sizes = [2, 32], strides = [1, 1]} : vector<2x128xf32> to vector<2x32xf32>
    %115 = vector.extract_strided_slice %112 {offsets = [0, 32], sizes = [2, 32], strides = [1, 1]} : vector<2x128xf32> to vector<2x32xf32>
    %116 = vector.extract_strided_slice %112 {offsets = [0, 96], sizes = [2, 32], strides = [1, 1]} : vector<2x128xf32> to vector<2x32xf32>
    %117 = vector.extract_strided_slice %113 {offsets = [0, 64], sizes = [2, 32], strides = [1, 1]} : vector<2x128xf32> to vector<2x32xf32>
    %118 = arith.mulf %115, %97 : vector<2x32xf32>
    %119 = arith.mulf %114, %117 : vector<2x32xf32>
    %120 = arith.addf %118, %119 : vector<2x32xf32>
    %121 = math.tanh %120 : vector<2x32xf32>
    %122 = arith.mulf %116, %121 : vector<2x32xf32>
    %cst_30 = arith.constant dense<0.000000e+00> : vector<2x128xf32>
    %123 = tpu.matmul %122, %3, %cst_30 {dimension_numbers = #tpu.dot_dimension_numbers<[1], [0], [0], [1], [0, 0, 1, 1], [], []>} : vector<2x32xf32>, vector<32x128xf32>, vector<2x128xf32> -> vector<2x128xf32>
    %124 = vector.broadcast %4 : vector<1x128xf32> to vector<2x128xf32>
    %125 = arith.addf %123, %124 : vector<2x128xf32>
    %cst_31 = arith.constant 0.000000e+00 : f32
    %126 = vector.broadcast %cst_31 : f32 to vector<2x128xf32>
    %127 = arith.maximumf %125, %126 : vector<2x128xf32>
    %128 = vector.extract_strided_slice %12 {offsets = [10, 0], sizes = [2, 128], strides = [1, 1]} : vector<16x128xf32> to vector<2x128xf32>
    %cst_32 = arith.constant dense<0.000000e+00> : vector<2x128xf32>
    %129 = tpu.matmul %122, %1, %cst_32 {dimension_numbers = #tpu.dot_dimension_numbers<[1], [0], [0], [1], [0, 0, 1, 1], [], []>} : vector<2x32xf32>, vector<32x128xf32>, vector<2x128xf32> -> vector<2x128xf32>
    %130 = arith.addf %128, %129 : vector<2x128xf32>
    %131 = arith.negf %130 : vector<2x128xf32>
    %132 = math.exp %131 : vector<2x128xf32>
    %cst_33 = arith.constant 1.000000e+00 : f32
    %133 = vector.broadcast %cst_33 : f32 to vector<2x128xf32>
    %134 = arith.addf %133, %132 : vector<2x128xf32>
    %135 = arith.divf %133, %134 : vector<2x128xf32>
    %136 = math.tanh %130 : vector<2x128xf32>
    %137 = vector.extract_strided_slice %135 {offsets = [0, 0], sizes = [2, 32], strides = [1, 1]} : vector<2x128xf32> to vector<2x32xf32>
    %138 = vector.extract_strided_slice %135 {offsets = [0, 32], sizes = [2, 32], strides = [1, 1]} : vector<2x128xf32> to vector<2x32xf32>
    %139 = vector.extract_strided_slice %135 {offsets = [0, 96], sizes = [2, 32], strides = [1, 1]} : vector<2x128xf32> to vector<2x32xf32>
    %140 = vector.extract_strided_slice %136 {offsets = [0, 64], sizes = [2, 32], strides = [1, 1]} : vector<2x128xf32> to vector<2x32xf32>
    %141 = arith.mulf %138, %120 : vector<2x32xf32>
    %142 = arith.mulf %137, %140 : vector<2x32xf32>
    %143 = arith.addf %141, %142 : vector<2x32xf32>
    %144 = math.tanh %143 : vector<2x32xf32>
    %145 = arith.mulf %139, %144 : vector<2x32xf32>
    %cst_34 = arith.constant dense<0.000000e+00> : vector<2x128xf32>
    %146 = tpu.matmul %145, %3, %cst_34 {dimension_numbers = #tpu.dot_dimension_numbers<[1], [0], [0], [1], [0, 0, 1, 1], [], []>} : vector<2x32xf32>, vector<32x128xf32>, vector<2x128xf32> -> vector<2x128xf32>
    %147 = vector.broadcast %4 : vector<1x128xf32> to vector<2x128xf32>
    %148 = arith.addf %146, %147 : vector<2x128xf32>
    %cst_35 = arith.constant 0.000000e+00 : f32
    %149 = vector.broadcast %cst_35 : f32 to vector<2x128xf32>
    %150 = arith.maximumf %148, %149 : vector<2x128xf32>
    %151 = vector.extract_strided_slice %12 {offsets = [12, 0], sizes = [2, 128], strides = [1, 1]} : vector<16x128xf32> to vector<2x128xf32>
    %cst_36 = arith.constant dense<0.000000e+00> : vector<2x128xf32>
    %152 = tpu.matmul %145, %1, %cst_36 {dimension_numbers = #tpu.dot_dimension_numbers<[1], [0], [0], [1], [0, 0, 1, 1], [], []>} : vector<2x32xf32>, vector<32x128xf32>, vector<2x128xf32> -> vector<2x128xf32>
    %153 = arith.addf %151, %152 : vector<2x128xf32>
    %154 = arith.negf %153 : vector<2x128xf32>
    %155 = math.exp %154 : vector<2x128xf32>
    %cst_37 = arith.constant 1.000000e+00 : f32
    %156 = vector.broadcast %cst_37 : f32 to vector<2x128xf32>
    %157 = arith.addf %156, %155 : vector<2x128xf32>
    %158 = arith.divf %156, %157 : vector<2x128xf32>
    %159 = math.tanh %153 : vector<2x128xf32>
    %160 = vector.extract_strided_slice %158 {offsets = [0, 0], sizes = [2, 32], strides = [1, 1]} : vector<2x128xf32> to vector<2x32xf32>
    %161 = vector.extract_strided_slice %158 {offsets = [0, 32], sizes = [2, 32], strides = [1, 1]} : vector<2x128xf32> to vector<2x32xf32>
    %162 = vector.extract_strided_slice %158 {offsets = [0, 96], sizes = [2, 32], strides = [1, 1]} : vector<2x128xf32> to vector<2x32xf32>
    %163 = vector.extract_strided_slice %159 {offsets = [0, 64], sizes = [2, 32], strides = [1, 1]} : vector<2x128xf32> to vector<2x32xf32>
    %164 = arith.mulf %161, %143 : vector<2x32xf32>
    %165 = arith.mulf %160, %163 : vector<2x32xf32>
    %166 = arith.addf %164, %165 : vector<2x32xf32>
    %167 = math.tanh %166 : vector<2x32xf32>
    %168 = arith.mulf %162, %167 : vector<2x32xf32>
    %cst_38 = arith.constant dense<0.000000e+00> : vector<2x128xf32>
    %169 = tpu.matmul %168, %3, %cst_38 {dimension_numbers = #tpu.dot_dimension_numbers<[1], [0], [0], [1], [0, 0, 1, 1], [], []>} : vector<2x32xf32>, vector<32x128xf32>, vector<2x128xf32> -> vector<2x128xf32>
    %170 = vector.broadcast %4 : vector<1x128xf32> to vector<2x128xf32>
    %171 = arith.addf %169, %170 : vector<2x128xf32>
    %cst_39 = arith.constant 0.000000e+00 : f32
    %172 = vector.broadcast %cst_39 : f32 to vector<2x128xf32>
    %173 = arith.maximumf %171, %172 : vector<2x128xf32>
    %174 = vector.extract_strided_slice %12 {offsets = [14, 0], sizes = [2, 128], strides = [1, 1]} : vector<16x128xf32> to vector<2x128xf32>
    %cst_40 = arith.constant dense<0.000000e+00> : vector<2x128xf32>
    %175 = tpu.matmul %168, %1, %cst_40 {dimension_numbers = #tpu.dot_dimension_numbers<[1], [0], [0], [1], [0, 0, 1, 1], [], []>} : vector<2x32xf32>, vector<32x128xf32>, vector<2x128xf32> -> vector<2x128xf32>
    %176 = arith.addf %174, %175 : vector<2x128xf32>
    %177 = arith.negf %176 : vector<2x128xf32>
    %178 = math.exp %177 : vector<2x128xf32>
    %cst_41 = arith.constant 1.000000e+00 : f32
    %179 = vector.broadcast %cst_41 : f32 to vector<2x128xf32>
    %180 = arith.addf %179, %178 : vector<2x128xf32>
    %181 = arith.divf %179, %180 : vector<2x128xf32>
    %182 = math.tanh %176 : vector<2x128xf32>
    %183 = vector.extract_strided_slice %181 {offsets = [0, 0], sizes = [2, 32], strides = [1, 1]} : vector<2x128xf32> to vector<2x32xf32>
    %184 = vector.extract_strided_slice %181 {offsets = [0, 32], sizes = [2, 32], strides = [1, 1]} : vector<2x128xf32> to vector<2x32xf32>
    %185 = vector.extract_strided_slice %181 {offsets = [0, 96], sizes = [2, 32], strides = [1, 1]} : vector<2x128xf32> to vector<2x32xf32>
    %186 = vector.extract_strided_slice %182 {offsets = [0, 64], sizes = [2, 32], strides = [1, 1]} : vector<2x128xf32> to vector<2x32xf32>
    %187 = arith.mulf %184, %166 : vector<2x32xf32>
    %188 = arith.mulf %183, %186 : vector<2x32xf32>
    %189 = arith.addf %187, %188 : vector<2x32xf32>
    %190 = math.tanh %189 : vector<2x32xf32>
    %191 = arith.mulf %185, %190 : vector<2x32xf32>
    %cst_42 = arith.constant dense<0.000000e+00> : vector<2x128xf32>
    %192 = tpu.matmul %191, %3, %cst_42 {dimension_numbers = #tpu.dot_dimension_numbers<[1], [0], [0], [1], [0, 0, 1, 1], [], []>} : vector<2x32xf32>, vector<32x128xf32>, vector<2x128xf32> -> vector<2x128xf32>
    %193 = vector.broadcast %4 : vector<1x128xf32> to vector<2x128xf32>
    %194 = arith.addf %192, %193 : vector<2x128xf32>
    %cst_43 = arith.constant 0.000000e+00 : f32
    %195 = vector.broadcast %cst_43 : f32 to vector<2x128xf32>
    %196 = arith.maximumf %194, %195 : vector<2x128xf32>
    %197 = tpu.concatenate %35, %58, %81, %104, %127, %150, %173, %196 in 0 : vector<2x128xf32>, vector<2x128xf32>, vector<2x128xf32>, vector<2x128xf32>, vector<2x128xf32>, vector<2x128xf32>, vector<2x128xf32>, vector<2x128xf32> -> vector<16x128xf32>
    %cst_44 = arith.constant dense<0.000000e+00> : vector<16x128xf32>
    %198 = tpu.matmul %197, %5, %cst_44 {dimension_numbers = #tpu.dot_dimension_numbers<[1], [0], [0], [1], [0, 0, 1, 1], [], []>} : vector<16x128xf32>, vector<128x128xf32>, vector<16x128xf32> -> vector<16x128xf32>
    %199 = vector.broadcast %6 : vector<1x128xf32> to vector<16x128xf32>
    %200 = arith.addf %198, %199 : vector<16x128xf32>
    %c0_45 = arith.constant 0 : index
    %c0_46 = arith.constant 0 : index
    %201 = vector.load %arg3[%c0_45, %c0_46] : memref<20x128xf32, #tpu.memory_space<vmem>>, vector<16x128xf32>
    tpu.vector_store %arg3[%c0_45, %c0_46], %200 {strides = array<i32>} : memref<20x128xf32, #tpu.memory_space<vmem>>, vector<16x128xf32>,
    %202 = tpu.concatenate %191, %189 in 0 : vector<2x32xf32>, vector<2x32xf32> -> vector<4x32xf32>
    %cst_47 = arith.constant 0.000000e+00 : f32
    %203 = vector.broadcast %cst_47 : f32 to vector<4x96xf32>
    %204 = tpu.concatenate %202, %203 in 1 : vector<4x32xf32>, vector<4x96xf32> -> vector<4x128xf32>
    %c16_48 = arith.constant 16 : index
    %c0_49 = arith.constant 0 : index
    %205 = vector.load %arg3[%c16_48, %c0_49] : memref<20x128xf32, #tpu.memory_space<vmem>>, vector<4x128xf32>
    tpu.vector_store %arg3[%c16_48, %c0_49], %204 {strides = array<i32>} : memref<20x128xf32, #tpu.memory_space<vmem>>, vector<4x128xf32>,
    return
  }
}

</mosaic_0001>

<llo_original>
// kernel: encoder_forward.1
$region0: #{encoder_forward.1}
  #allocation0 [shape = 'u32[]', space=smem, size = 0x4, offset = 0x4, fixed_abs, tag = 'smem constant byte address 0x4 - core index']
  #allocation1 [shape = 'u32[144,128]{1,0:T(1,128)}', space=vmem, size = 0x12000, scoped, tag = 'internal scratch']
  %s0 = inlined_call_operand.vmem [shape: f32[16,16], index: 0, kind: input, shape index: {}]
  %s1 = inlined_call_operand.vmem [shape: f32[4,32], index: 1, kind: input, shape index: {}]
  %s2 = inlined_call_operand.hbm [shape: f32[232,128], index: 2, kind: input, shape index: {}]
  %s3 = inlined_call_operand.vmem [shape: f32[20,128], index: 3, kind: output, shape index: {}]
  %s4 = sld [smem:[#allocation0]]
  $region26: #{encoder_forward.1} parent=0
    _
  %s6 = ssub.s32 1, %s4
  %s7 = scalar_select 0, %s6, %s4
  $region1: #{encoder_forward.1} parent=0
    #allocation2 [shape = 'u8[118784]{0}', space=vmem, size = 0x1d000, scoped, tag = 'input window, operand 2, single buffered']
    #allocation3 [shape = 's32[1]{0}', space=sflag, size = 0x4, scoped, tag = 'scoped memory for encoder_forward.1']
    %8 = vsyncpa [#allocation3], 0
    // Predicated region
    $region2: #{encoder_forward.1} parent=1 // pred_check
      _
    $region3: #{encoder_forward.1} parent=1 // pred_check_branch
      %10 = sbr.rel (0) target = $region5
    $region4: #{encoder_forward.1} parent=1 // pred_region
      _
    $region5: #{encoder_forward.1} parent=1 // pred_fallthru
      _
    // Predicated region
    $region6: #{encoder_forward.1} parent=1 // pred_check
      _
    $region7: #{encoder_forward.1} parent=1 // pred_check_branch
      %12 = sbr.rel (0) target = $region9
    $region8: #{encoder_forward.1} parent=1 // pred_region
      _
    $region9: #{encoder_forward.1} parent=1 // pred_fallthru
      _
    // Predicated region
    $region10: #{encoder_forward.1} parent=1 // pred_check
      _
    $region11: #{encoder_forward.1} parent=1 // pred_check_branch
      %14 = sbr.rel (0) target = $region13
    $region12: #{encoder_forward.1} parent=1 // pred_region
      %s16 = ssub.s32 3712, 3712
      %17 = vsyncadd [#allocation3], %s16
      %s18 = sshll.u32 [#allocation2], 4
      %s19 = int_to_ptr.vmem [resolvable:$true] %s18
      %24 = dma.hbm_to_vmem [thread:$0]  %s2, 3712, %s19, [#allocation3], 128, 128, 8
    $region13: #{encoder_forward.1} parent=1 // pred_fallthru
      _
    // Predicated region
    $region14: #{encoder_forward.1} parent=1 // pred_check
      _
    $region15: #{encoder_forward.1} parent=1 // pred_check_branch
      %26 = sbr.rel (0) target = $region17
    $region16: #{encoder_forward.1} parent=1 // pred_region
      %27 = dma.done [#allocation3], 3712
    $region17: #{encoder_forward.1} parent=1 // pred_fallthru
      _
    %v28 = vld [vmem:[#allocation2] sm:$0xff]
    %v29 = vld [vmem:[#allocation2 + $0x8] sm:$0xff]
    %v30 = vld [vmem:[#allocation2 + $0x10] sm:$0xff]
    %v31 = vld [vmem:[#allocation2 + $0x18] sm:$0xff]
    %v32 = vld [vmem:[#allocation2 + $0x20] sm:$0xff]
    %v33 = vld [vmem:[#allocation2 + $0x28] sm:$0xff]
    %v34 = vld [vmem:[#allocation2 + $0x30] sm:$0x1]
    %v35 = vld [vmem:[#allocation2 + $0x38] sm:$0xff]
    %v36 = vld [vmem:[#allocation2 + $0x40] sm:$0xff]
    %v37 = vld [vmem:[#allocation2 + $0x48] sm:$0xff]
    %v38 = vld [vmem:[#allocation2 + $0x50] sm:$0xff]
    %v39 = vld [vmem:[#allocation2 + $0x58] sm:$0x1]
    %v40 = vld [vmem:[#allocation2 + $0x60] sm:$0xff]
    %v41 = vld [vmem:[#allocation2 + $0x68] sm:$0xff]
    %v42 = vld [vmem:[#allocation2 + $0x70] sm:$0xff]
    %v43 = vld [vmem:[#allocation2 + $0x78] sm:$0xff]
    %v44 = vld [vmem:[#allocation2 + $0x80] sm:$0xff]
    %v45 = vld [vmem:[#allocation2 + $0x88] sm:$0xff]
    %v46 = vld [vmem:[#allocation2 + $0x90] sm:$0xff]
    %v47 = vld [vmem:[#allocation2 + $0x98] sm:$0xff]
    %v48 = vld [vmem:[#allocation2 + $0xa0] sm:$0xff]
    %v49 = vld [vmem:[#allocation2 + $0xa8] sm:$0xff]
    %v50 = vld [vmem:[#allocation2 + $0xb0] sm:$0xff]
    %v51 = vld [vmem:[#allocation2 + $0xb8] sm:$0xff]
    %v52 = vld [vmem:[#allocation2 + $0xc0] sm:$0xff]
    %v53 = vld [vmem:[#allocation2 + $0xc8] sm:$0xff]
    %v54 = vld [vmem:[#allocation2 + $0xd0] sm:$0xff]
    %v55 = vld [vmem:[#allocation2 + $0xd8] sm:$0xff]
    %v56 = vld [vmem:[#allocation2 + $0xe0] sm:$0x1]
    %v57 = vld [vmem:[%s1] sm:$0x3]
    %v58 = vld [vmem:[%s1 + $0x2] sm:$0x3]
    %v59 = vld [vmem:[%s0] sm:$0xff]
    %v60 = vld [vmem:[%s0 + $0x8] sm:$0xff]
    %v61 = vlaneseq
    %v62 = vshrl.u32 %v61, 7
    %v63 = vsub.s32 0, %v62
    %v64 = vrot.slane %v34, %v63
    %vm65 = vcmask 130048
    %v67 = vsel %vm65, %v59, 0
    %v70 = vsel %vm65, %v60, 0
    %72 = vmatprep.subr.mxu0 0.0
    %73 = vmatpush1.msra.mxu0 %v28
    %74 = vmatprep.subr.mxu0 0.0
    %75 = vmatpush1.msra.mxu0 %v29
    %76 = vmatprep.subr.mxu0 0.0
    %77 = vmatpush1.msra.mxu0 0.0
    %78 = vmatprep.subr.mxu0 0.0
    %79 = vmatpush1.msra.mxu0 0.0
    %80 = vmatprep.subr.mxu0 0.0
    %81 = vmatpush1.msra.mxu0 0.0
    %82 = vmatprep.subr.mxu0 0.0
    %83 = vmatpush1.msra.mxu0 0.0
    %84 = vmatprep.subr.mxu0 0.0
    %85 = vmatpush1.msra.mxu0 0.0
    %86 = vmatprep.subr.mxu0 0.0
    %87 = vmatpush1.msra.mxu0 0.0
    %88 = vmatprep.subr.mxu0 0.0
    %89 = vmatpush1.msra.mxu0 0.0
    %90 = vmatprep.subr.mxu0 0.0
    %91 = vmatpush1.msra.mxu0 0.0
    %92 = vmatprep.subr.mxu0 0.0
    %93 = vmatpush1.msra.mxu0 0.0
    %94 = vmatprep.subr.mxu0 0.0
    %95 = vmatpush1.msra.mxu0 0.0
    %96 = vmatprep.subr.mxu0 0.0
    %97 = vmatpush1.msra.mxu0 0.0
    %98 = vmatprep.subr.mxu0 0.0
    %99 = vmatpush1.msra.mxu0 0.0
    %100 = vmatprep.subr.mxu0 0.0
    %101 = vmatpush1.msra.mxu0 0.0
    %102 = vmatprep.subr.mxu0 0.0
    %103 = vmatpush1.msra.mxu0 0.0
    %104 = vmatprep.subr.mxu0 0.0
    %105 = vmatpush1.msra.mxu0 0.0
    %106 = vmatprep.subr.mxu0 0.0
    %107 = vmatpush1.msra.mxu0 0.0
    %108 = vmatprep.subr.mxu0 0.0
    %109 = vmatpush1.msra.mxu0 0.0
    %110 = vmatprep.subr.mxu0 0.0
    %111 = vmatpush1.msra.mxu0 0.0
    %112 = vmatprep.subr.mxu0 0.0
    %113 = vmatpush1.msra.mxu0 0.0
    %114 = vmatprep.subr.mxu0 0.0
    %115 = vmatpush1.msra.mxu0 0.0
    %116 = vmatprep.subr.mxu0 0.0
    %117 = vmatpush1.msra.mxu0 0.0
    %118 = vmatprep.subr.mxu0 0.0
    %119 = vmatpush1.msra.mxu0 0.0
    %120 = vmatprep.subr.mxu0 0.0
    %121 = vmatpush1.msra.mxu0 0.0
    %122 = vmatprep.subr.mxu0 0.0
    %123 = vmatpush1.msra.mxu0 0.0
    %124 = vmatprep.subr.mxu0 0.0
    %125 = vmatpush1.msra.mxu0 0.0
    %126 = vmatprep.subr.mxu0 0.0
    %127 = vmatpush1.msra.mxu0 0.0
    %128 = vmatprep.subr.mxu0 0.0
    %129 = vmatpush1.msra.mxu0 0.0
    %130 = vmatprep.subr.mxu0 0.0
    %131 = vmatpush1.msra.mxu0 0.0
    %132 = vmatprep.subr.mxu0 0.0
    %133 = vmatpush1.msra.mxu0 0.0
    %134 = vmatprep.subr.mxu0 0.0
    %135 = vmatpush1.msra.mxu0 0.0
    %136 = vmatprep.mubr.f32.mxu0 0.0
    %137 = vmatmul.mubr.f32.gmra.mrb[0].mxu0 %v67
    %v138 = vpop.f32.mrb[0].mxu0
    %v139 = vadd.f32 %v64, %v138
    %v140 = vpop.f32.mrb[0].mxu0
    %141 = vmatprep.mubr.f32.mxu0 0.0
    %142 = vmatmul.mubr.f32.gmra.mrb[0].mxu0 %v70
    %v143 = vpop.f32.mrb[0].mxu0
    %v144 = vadd.f32 %v64, %v143
    %v145 = vpop.f32.mrb[0].mxu0
    %146 = vdwg.mxu0
    %vm147 = vcmask 261120
    %v149 = vsel %vm147, %v57, 0
    %151 = vmatprep.subr.mxu0 0.0
    %152 = vmatpush1.msra.mxu0 %v30
    %153 = vmatprep.subr.mxu0 0.0
    %154 = vmatpush1.msra.mxu0 %v31
    %155 = vmatprep.subr.mxu0 0.0
    %156 = vmatpush1.msra.mxu0 %v32
    %157 = vmatprep.subr.mxu0 0.0
    %158 = vmatpush1.msra.mxu0 %v33
    %159 = vmatprep.subr.mxu0 0.0
    %160 = vmatpush1.msra.mxu0 0.0
    %161 = vmatprep.subr.mxu0 0.0
    %162 = vmatpush1.msra.mxu0 0.0
    %163 = vmatprep.subr.mxu0 0.0
    %164 = vmatpush1.msra.mxu0 0.0
    %165 = vmatprep.subr.mxu0 0.0
    %166 = vmatpush1.msra.mxu0 0.0
    %167 = vmatprep.subr.mxu0 0.0
    %168 = vmatpush1.msra.mxu0 0.0
    %169 = vmatprep.subr.mxu0 0.0
    %170 = vmatpush1.msra.mxu0 0.0
    %171 = vmatprep.subr.mxu0 0.0
    %172 = vmatpush1.msra.mxu0 0.0
    %173 = vmatprep.subr.mxu0 0.0
    %174 = vmatpush1.msra.mxu0 0.0
    %175 = vmatprep.subr.mxu0 0.0
    %176 = vmatpush1.msra.mxu0 0.0
    %177 = vmatprep.subr.mxu0 0.0
    %178 = vmatpush1.msra.mxu0 0.0
    %179 = vmatprep.subr.mxu0 0.0
    %180 = vmatpush1.msra.mxu0 0.0
    %181 = vmatprep.subr.mxu0 0.0
    %182 = vmatpush1.msra.mxu0 0.0
    %183 = vmatprep.subr.mxu0 0.0
    %184 = vmatpush1.msra.mxu0 0.0
    %185 = vmatprep.subr.mxu0 0.0
    %186 = vmatpush1.msra.mxu0 0.0
    %187 = vmatprep.subr.mxu0 0.0
    %188 = vmatpush1.msra.mxu0 0.0
    %189 = vmatprep.subr.mxu0 0.0
    %190 = vmatpush1.msra.mxu0 0.0
    %191 = vmatprep.subr.mxu0 0.0
    %192 = vmatpush1.msra.mxu0 0.0
    %193 = vmatprep.subr.mxu0 0.0
    %194 = vmatpush1.msra.mxu0 0.0
    %195 = vmatprep.subr.mxu0 0.0
    %196 = vmatpush1.msra.mxu0 0.0
    %197 = vmatprep.subr.mxu0 0.0
    %198 = vmatpush1.msra.mxu0 0.0
    %199 = vmatprep.subr.mxu0 0.0
    %200 = vmatpush1.msra.mxu0 0.0
    %201 = vmatprep.subr.mxu0 0.0
    %202 = vmatpush1.msra.mxu0 0.0
    %203 = vmatprep.subr.mxu0 0.0
    %204 = vmatpush1.msra.mxu0 0.0
    %205 = vmatprep.subr.mxu0 0.0
    %206 = vmatpush1.msra.mxu0 0.0
    %207 = vmatprep.subr.mxu0 0.0
    %208 = vmatpush1.msra.mxu0 0.0
    %209 = vmatprep.subr.mxu0 0.0
    %210 = vmatpush1.msra.mxu0 0.0
    %211 = vmatprep.subr.mxu0 0.0
    %212 = vmatpush1.msra.mxu0 0.0
    %213 = vmatprep.subr.mxu0 0.0
    %214 = vmatpush1.msra.mxu0 0.0
    %215 = vmatprep.mubr.f32.mxu0 0.0
    %216 = vmatmul.mubr.f32.gmra.mrb[0].mxu0 %v149
    %v217 = vpop.f32.mrb[0].mxu0
    %v218 = vadd.f32 0.0, %v217
    %v219 = vpop.f32.mrb[0].mxu0
    %220 = vdwg.mxu0
    %v221 = vadd.f32 %v139, %v218
    %v222 = vxor.u32 %v221, 2147483648
    %v223 = vmul.f32 %v222, 1.442695
    %v224 = vpow.pop %v223
    %v225 = vadd.f32 %v224, 1.0
    %v226 = vrcp.pop %v225
    %v227 = vmul.f32 1.0, %v226
    %v228 = vtanh.pop %v221
    %230 = vrot.lane.b32.xlu0 %v58, 32
    %v231 = vpop.permute.xlu0 %230
    %v233 = vmul.f32 %v227, %v231
    %235 = vrot.lane.b32.xlu0 %v228, 64
    %v236 = vpop.permute.xlu0 %235
    %v238 = vmul.f32 %v227, %v236
    %240 = vrot.lane.b32.xlu0 %v238, 32
    %v241 = vpop.permute.xlu0 %240
    %v243 = vadd.f32 %v233, %v241
    %v244 = vtanh.pop %v243
    %246 = vrot.lane.b32.xlu0 %v244, 64
    %v247 = vpop.permute.xlu0 %246
    %v249 = vmul.f32 %v227, %v247
    %v250 = vlaneseq
    %v251 = vshrl.u32 %v250, 7
    %v252 = vsub.s32 0, %v251
    %v253 = vrot.slane %v39, %v252
    %255 = vrot.lane.b32.xlu0 %v249, 32
    %v256 = vpop.permute.xlu0 %255
    %v257 = vsel %vm147, %v256, 0
    %259 = vmatprep.subr.mxu0 0.0
    %260 = vmatpush1.msra.mxu0 %v35
    %261 = vmatprep.subr.mxu0 0.0
    %262 = vmatpush1.msra.mxu0 %v36
    %263 = vmatprep.subr.mxu0 0.0
    %264 = vmatpush1.msra.mxu0 %v37
    %265 = vmatprep.subr.mxu0 0.0
    %266 = vmatpush1.msra.mxu0 %v38
    %267 = vmatprep.subr.mxu0 0.0
    %268 = vmatpush1.msra.mxu0 0.0
    %269 = vmatprep.subr.mxu0 0.0
    %270 = vmatpush1.msra.mxu0 0.0
    %271 = vmatprep.subr.mxu0 0.0
    %272 = vmatpush1.msra.mxu0 0.0
    %273 = vmatprep.subr.mxu0 0.0
    %274 = vmatpush1.msra.mxu0 0.0
    %275 = vmatprep.subr.mxu0 0.0
    %276 = vmatpush1.msra.mxu0 0.0
    %277 = vmatprep.subr.mxu0 0.0
    %278 = vmatpush1.msra.mxu0 0.0
    %279 = vmatprep.subr.mxu0 0.0
    %280 = vmatpush1.msra.mxu0 0.0
    %281 = vmatprep.subr.mxu0 0.0
    %282 = vmatpush1.msra.mxu0 0.0
    %283 = vmatprep.subr.mxu0 0.0
    %284 = vmatpush1.msra.mxu0 0.0
    %285 = vmatprep.subr.mxu0 0.0
    %286 = vmatpush1.msra.mxu0 0.0
    %287 = vmatprep.subr.mxu0 0.0
    %288 = vmatpush1.msra.mxu0 0.0
    %289 = vmatprep.subr.mxu0 0.0
    %290 = vmatpush1.msra.mxu0 0.0
    %291 = vmatprep.subr.mxu0 0.0
    %292 = vmatpush1.msra.mxu0 0.0
    %293 = vmatprep.subr.mxu0 0.0
    %294 = vmatpush1.msra.mxu0 0.0
    %295 = vmatprep.subr.mxu0 0.0
    %296 = vmatpush1.msra.mxu0 0.0
    %297 = vmatprep.subr.mxu0 0.0
    %298 = vmatpush1.msra.mxu0 0.0
    %299 = vmatprep.subr.mxu0 0.0
    %300 = vmatpush1.msra.mxu0 0.0
    %301 = vmatprep.subr.mxu0 0.0
    %302 = vmatpush1.msra.mxu0 0.0
    %303 = vmatprep.subr.mxu0 0.0
    %304 = vmatpush1.msra.mxu0 0.0
    %305 = vmatprep.subr.mxu0 0.0
    %306 = vmatpush1.msra.mxu0 0.0
    %307 = vmatprep.subr.mxu0 0.0
    %308 = vmatpush1.msra.mxu0 0.0
    %309 = vmatprep.subr.mxu0 0.0
    %310 = vmatpush1.msra.mxu0 0.0
    %311 = vmatprep.subr.mxu0 0.0
    %312 = vmatpush1.msra.mxu0 0.0
    %313 = vmatprep.subr.mxu0 0.0
    %314 = vmatpush1.msra.mxu0 0.0
    %315 = vmatprep.subr.mxu0 0.0
    %316 = vmatpush1.msra.mxu0 0.0
    %317 = vmatprep.subr.mxu0 0.0
    %318 = vmatpush1.msra.mxu0 0.0
    %319 = vmatprep.subr.mxu0 0.0
    %320 = vmatpush1.msra.mxu0 0.0
    %321 = vmatprep.subr.mxu0 0.0
    %322 = vmatpush1.msra.mxu0 0.0
    %323 = vmatprep.mubr.f32.mxu0 0.0
    %324 = vmatmul.mubr.f32.gmra.mrb[0].mxu0 %v257
    %v325 = vpop.f32.mrb[0].mxu0
    %v326 = vadd.f32 %v253, %v325
    %v327 = vpop.f32.mrb[0].mxu0
    %328 = vdwg.mxu0
    %v329 = vmax.f32 %v326, 0.0
    %330 = vmatprep.subr.mxu0 0.0
    %331 = vmatpush1.msra.mxu0 %v30
    %332 = vmatprep.subr.mxu0 0.0
    %333 = vmatpush1.msra.mxu0 %v31
    %334 = vmatprep.subr.mxu0 0.0
    %335 = vmatpush1.msra.mxu0 %v32
    %336 = vmatprep.subr.mxu0 0.0
    %337 = vmatpush1.msra.mxu0 %v33
    %338 = vmatprep.subr.mxu0 0.0
    %339 = vmatpush1.msra.mxu0 0.0
    %340 = vmatprep.subr.mxu0 0.0
    %341 = vmatpush1.msra.mxu0 0.0
    %342 = vmatprep.subr.mxu0 0.0
    %343 = vmatpush1.msra.mxu0 0.0
    %344 = vmatprep.subr.mxu0 0.0
    %345 = vmatpush1.msra.mxu0 0.0
    %346 = vmatprep.subr.mxu0 0.0
    %347 = vmatpush1.msra.mxu0 0.0
    %348 = vmatprep.subr.mxu0 0.0
    %349 = vmatpush1.msra.mxu0 0.0
    %350 = vmatprep.subr.mxu0 0.0
    %351 = vmatpush1.msra.mxu0 0.0
    %352 = vmatprep.subr.mxu0 0.0
    %353 = vmatpush1.msra.mxu0 0.0
    %354 = vmatprep.subr.mxu0 0.0
    %355 = vmatpush1.msra.mxu0 0.0
    %356 = vmatprep.subr.mxu0 0.0
    %357 = vmatpush1.msra.mxu0 0.0
    %358 = vmatprep.subr.mxu0 0.0
    %359 = vmatpush1.msra.mxu0 0.0
    %360 = vmatprep.subr.mxu0 0.0
    %361 = vmatpush1.msra.mxu0 0.0
    %362 = vmatprep.subr.mxu0 0.0
    %363 = vmatpush1.msra.mxu0 0.0
    %364 = vmatprep.subr.mxu0 0.0
    %365 = vmatpush1.msra.mxu0 0.0
    %366 = vmatprep.subr.mxu0 0.0
    %367 = vmatpush1.msra.mxu0 0.0
    %368 = vmatprep.subr.mxu0 0.0
    %369 = vmatpush1.msra.mxu0 0.0
    %370 = vmatprep.subr.mxu0 0.0
    %371 = vmatpush1.msra.mxu0 0.0
    %372 = vmatprep.subr.mxu0 0.0
    %373 = vmatpush1.msra.mxu0 0.0
    %374 = vmatprep.subr.mxu0 0.0
    %375 = vmatpush1.msra.mxu0 0.0
    %376 = vmatprep.subr.mxu0 0.0
    %377 = vmatpush1.msra.mxu0 0.0
    %378 = vmatprep.subr.mxu0 0.0
    %379 = vmatpush1.msra.mxu0 0.0
    %380 = vmatprep.subr.mxu0 0.0
    %381 = vmatpush1.msra.mxu0 0.0
    %382 = vmatprep.subr.mxu0 0.0
    %383 = vmatpush1.msra.mxu0 0.0
    %384 = vmatprep.subr.mxu0 0.0
    %385 = vmatpush1.msra.mxu0 0.0
    %386 = vmatprep.subr.mxu0 0.0
    %387 = vmatpush1.msra.mxu0 0.0
    %388 = vmatprep.subr.mxu0 0.0
    %389 = vmatpush1.msra.mxu0 0.0
    %390 = vmatprep.subr.mxu0 0.0
    %391 = vmatpush1.msra.mxu0 0.0
    %392 = vmatprep.subr.mxu0 0.0
    %393 = vmatpush1.msra.mxu0 0.0
    %394 = vmatprep.mubr.f32.mxu0 0.0
    %395 = vmatmul.mubr.f32.gmra.mrb[0].mxu0 %v257
    %v396 = vpop.f32.mrb[0].mxu0
    %v397 = vadd.f32 0.0, %v396
    %v398 = vpop.f32.mrb[0].mxu0
    %399 = vdwg.mxu0
    %v401 = vrot.slane %v397, 6
    %v403 = vadd.f32 %v139, %v401
    %v404 = vxor.u32 %v403, 2147483648
    %v405 = vmul.f32 %v404, 1.442695
    %v406 = vpow.pop %v405
    %v407 = vadd.f32 %v406, 1.0
    %v408 = vrcp.pop %v407
    %v409 = vmul.f32 1.0, %v408
    %v410 = vtanh.pop %v403
    %v412 = vrot.slane %v243, 6
    %v414 = vmul.f32 %v409, %v412
    %416 = vrot.lane.b32.xlu0 %v410, 64
    %v417 = vpop.permute.xlu0 %416
    %v419 = vmul.f32 %v409, %v417
    %421 = vrot.lane.b32.xlu0 %v419, 32
    %v422 = vpop.permute.xlu0 %421
    %v424 = vadd.f32 %v414, %v422
    %v425 = vtanh.pop %v424
    %427 = vrot.lane.b32.xlu0 %v425, 64
    %v428 = vpop.permute.xlu0 %427
    %v430 = vmul.f32 %v409, %v428
    %v432 = vrot.slane %v430, 2
    %433 = vrot.lane.b32.xlu0 %v432, 32
    %v434 = vpop.permute.xlu0 %433
    %v435 = vsel %vm147, %v434, 0
    %437 = vmatprep.subr.mxu0 0.0
    %438 = vmatpush1.msra.mxu0 %v35
    %439 = vmatprep.subr.mxu0 0.0
    %440 = vmatpush1.msra.mxu0 %v36
    %441 = vmatprep.subr.mxu0 0.0
    %442 = vmatpush1.msra.mxu0 %v37
    %443 = vmatprep.subr.mxu0 0.0
    %444 = vmatpush1.msra.mxu0 %v38
    %445 = vmatprep.subr.mxu0 0.0
    %446 = vmatpush1.msra.mxu0 0.0
    %447 = vmatprep.subr.mxu0 0.0
    %448 = vmatpush1.msra.mxu0 0.0
    %449 = vmatprep.subr.mxu0 0.0
    %450 = vmatpush1.msra.mxu0 0.0
    %451 = vmatprep.subr.mxu0 0.0
    %452 = vmatpush1.msra.mxu0 0.0
    %453 = vmatprep.subr.mxu0 0.0
    %454 = vmatpush1.msra.mxu0 0.0
    %455 = vmatprep.subr.mxu0 0.0
    %456 = vmatpush1.msra.mxu0 0.0
    %457 = vmatprep.subr.mxu0 0.0
    %458 = vmatpush1.msra.mxu0 0.0
    %459 = vmatprep.subr.mxu0 0.0
    %460 = vmatpush1.msra.mxu0 0.0
    %461 = vmatprep.subr.mxu0 0.0
    %462 = vmatpush1.msra.mxu0 0.0
    %463 = vmatprep.subr.mxu0 0.0
    %464 = vmatpush1.msra.mxu0 0.0
    %465 = vmatprep.subr.mxu0 0.0
    %466 = vmatpush1.msra.mxu0 0.0
    %467 = vmatprep.subr.mxu0 0.0
    %468 = vmatpush1.msra.mxu0 0.0
    %469 = vmatprep.subr.mxu0 0.0
    %470 = vmatpush1.msra.mxu0 0.0
    %471 = vmatprep.subr.mxu0 0.0
    %472 = vmatpush1.msra.mxu0 0.0
    %473 = vmatprep.subr.mxu0 0.0
    %474 = vmatpush1.msra.mxu0 0.0
    %475 = vmatprep.subr.mxu0 0.0
    %476 = vmatpush1.msra.mxu0 0.0
    %477 = vmatprep.subr.mxu0 0.0
    %478 = vmatpush1.msra.mxu0 0.0
    %479 = vmatprep.subr.mxu0 0.0
    %480 = vmatpush1.msra.mxu0 0.0
    %481 = vmatprep.subr.mxu0 0.0
    %482 = vmatpush1.msra.mxu0 0.0
    %483 = vmatprep.subr.mxu0 0.0
    %484 = vmatpush1.msra.mxu0 0.0
    %485 = vmatprep.subr.mxu0 0.0
    %486 = vmatpush1.msra.mxu0 0.0
    %487 = vmatprep.subr.mxu0 0.0
    %488 = vmatpush1.msra.mxu0 0.0
    %489 = vmatprep.subr.mxu0 0.0
    %490 = vmatpush1.msra.mxu0 0.0
    %491 = vmatprep.subr.mxu0 0.0
    %492 = vmatpush1.msra.mxu0 0.0
    %493 = vmatprep.subr.mxu0 0.0
    %494 = vmatpush1.msra.mxu0 0.0
    %495 = vmatprep.subr.mxu0 0.0
    %496 = vmatpush1.msra.mxu0 0.0
    %497 = vmatprep.subr.mxu0 0.0
    %498 = vmatpush1.msra.mxu0 0.0
    %499 = vmatprep.subr.mxu0 0.0
    %500 = vmatpush1.msra.mxu0 0.0
    %501 = vmatprep.mubr.f32.mxu0 0.0
    %502 = vmatmul.mubr.f32.gmra.mrb[0].mxu0 %v435
    %v503 = vpop.f32.mrb[0].mxu0
    %v504 = vadd.f32 %v253, %v503
    %v505 = vpop.f32.mrb[0].mxu0
    %506 = vdwg.mxu0
    %v507 = vmax.f32 %v504, 0.0
    %508 = vmatprep.subr.mxu0 0.0
    %509 = vmatpush1.msra.mxu0 %v30
    %510 = vmatprep.subr.mxu0 0.0
    %511 = vmatpush1.msra.mxu0 %v31
    %512 = vmatprep.subr.mxu0 0.0
    %513 = vmatpush1.msra.mxu0 %v32
    %514 = vmatprep.subr.mxu0 0.0
    %515 = vmatpush1.msra.mxu0 %v33
    %516 = vmatprep.subr.mxu0 0.0
    %517 = vmatpush1.msra.mxu0 0.0
    %518 = vmatprep.subr.mxu0 0.0
    %519 = vmatpush1.msra.mxu0 0.0
    %520 = vmatprep.subr.mxu0 0.0
    %521 = vmatpush1.msra.mxu0 0.0
    %522 = vmatprep.subr.mxu0 0.0
    %523 = vmatpush1.msra.mxu0 0.0
    %524 = vmatprep.subr.mxu0 0.0
    %525 = vmatpush1.msra.mxu0 0.0
    %526 = vmatprep.subr.mxu0 0.0
    %527 = vmatpush1.msra.mxu0 0.0
    %528 = vmatprep.subr.mxu0 0.0
    %529 = vmatpush1.msra.mxu0 0.0
    %530 = vmatprep.subr.mxu0 0.0
    %531 = vmatpush1.msra.mxu0 0.0
    %532 = vmatprep.subr.mxu0 0.0
    %533 = vmatpush1.msra.mxu0 0.0
    %534 = vmatprep.subr.mxu0 0.0
    %535 = vmatpush1.msra.mxu0 0.0
    %536 = vmatprep.subr.mxu0 0.0
    %537 = vmatpush1.msra.mxu0 0.0
    %538 = vmatprep.subr.mxu0 0.0
    %539 = vmatpush1.msra.mxu0 0.0
    %540 = vmatprep.subr.mxu0 0.0
    %541 = vmatpush1.msra.mxu0 0.0
    %542 = vmatprep.subr.mxu0 0.0
    %543 = vmatpush1.msra.mxu0 0.0
    %544 = vmatprep.subr.mxu0 0.0
    %545 = vmatpush1.msra.mxu0 0.0
    %546 = vmatprep.subr.mxu0 0.0
    %547 = vmatpush1.msra.mxu0 0.0
    %548 = vmatprep.subr.mxu0 0.0
    %549 = vmatpush1.msra.mxu0 0.0
    %550 = vmatprep.subr.mxu0 0.0
    %551 = vmatpush1.msra.mxu0 0.0
    %552 = vmatprep.subr.mxu0 0.0
    %553 = vmatpush1.msra.mxu0 0.0
    %554 = vmatprep.subr.mxu0 0.0
    %555 = vmatpush1.msra.mxu0 0.0
    %556 = vmatprep.subr.mxu0 0.0
    %557 = vmatpush1.msra.mxu0 0.0
    %558 = vmatprep.subr.mxu0 0.0
    %559 = vmatpush1.msra.mxu0 0.0
    %560 = vmatprep.subr.mxu0 0.0
    %561 = vmatpush1.msra.mxu0 0.0
    %562 = vmatprep.subr.mxu0 0.0
    %563 = vmatpush1.msra.mxu0 0.0
    %564 = vmatprep.subr.mxu0 0.0
    %565 = vmatpush1.msra.mxu0 0.0
    %566 = vmatprep.subr.mxu0 0.0
    %567 = vmatpush1.msra.mxu0 0.0
    %568 = vmatprep.subr.mxu0 0.0
    %569 = vmatpush1.msra.mxu0 0.0
    %570 = vmatprep.subr.mxu0 0.0
    %571 = vmatpush1.msra.mxu0 0.0
    %572 = vmatprep.mubr.f32.mxu0 0.0
    %573 = vmatmul.mubr.f32.gmra.mrb[0].mxu0 %v435
    %v574 = vpop.f32.mrb[0].mxu0
    %v575 = vadd.f32 0.0, %v574
    %v576 = vpop.f32.mrb[0].mxu0
    %577 = vdwg.mxu0
    %v579 = vrot.slane %v575, 4
    %v581 = vadd.f32 %v139, %v579
    %v582 = vxor.u32 %v581, 2147483648
    %v583 = vmul.f32 %v582, 1.442695
    %v584 = vpow.pop %v583
    %v585 = vadd.f32 %v584, 1.0
    %v586 = vrcp.pop %v585
    %v587 = vmul.f32 1.0, %v586
    %v588 = vtanh.pop %v581
    %v590 = vrot.slane %v424, 6
    %v592 = vmul.f32 %v587, %v590
    %594 = vrot.lane.b32.xlu0 %v588, 64
    %v595 = vpop.permute.xlu0 %594
    %v597 = vmul.f32 %v587, %v595
    %599 = vrot.lane.b32.xlu0 %v597, 32
    %v600 = vpop.permute.xlu0 %599
    %v602 = vadd.f32 %v592, %v600
    %v603 = vtanh.pop %v602
    %605 = vrot.lane.b32.xlu0 %v603, 64
    %v606 = vpop.permute.xlu0 %605
    %v608 = vmul.f32 %v587, %v606
    %v610 = vrot.slane %v608, 4
    %611 = vrot.lane.b32.xlu0 %v610, 32
    %v612 = vpop.permute.xlu0 %611
    %v613 = vsel %vm147, %v612, 0
    %615 = vmatprep.subr.mxu0 0.0
    %616 = vmatpush1.msra.mxu0 %v35
    %617 = vmatprep.subr.mxu0 0.0
    %618 = vmatpush1.msra.mxu0 %v36
    %619 = vmatprep.subr.mxu0 0.0
    %620 = vmatpush1.msra.mxu0 %v37
    %621 = vmatprep.subr.mxu0 0.0
    %622 = vmatpush1.msra.mxu0 %v38
    %623 = vmatprep.subr.mxu0 0.0
    %624 = vmatpush1.msra.mxu0 0.0
    %625 = vmatprep.subr.mxu0 0.0
    %626 = vmatpush1.msra.mxu0 0.0
    %627 = vmatprep.subr.mxu0 0.0
    %628 = vmatpush1.msra.mxu0 0.0
    %629 = vmatprep.subr.mxu0 0.0
    %630 = vmatpush1.msra.mxu0 0.0
    %631 = vmatprep.subr.mxu0 0.0
    %632 = vmatpush1.msra.mxu0 0.0
    %633 = vmatprep.subr.mxu0 0.0
    %634 = vmatpush1.msra.mxu0 0.0
    %635 = vmatprep.subr.mxu0 0.0
    %636 = vmatpush1.msra.mxu0 0.0
    %637 = vmatprep.subr.mxu0 0.0
    %638 = vmatpush1.msra.mxu0 0.0
    %639 = vmatprep.subr.mxu0 0.0
    %640 = vmatpush1.msra.mxu0 0.0
    %641 = vmatprep.subr.mxu0 0.0
    %642 = vmatpush1.msra.mxu0 0.0
    %643 = vmatprep.subr.mxu0 0.0
    %644 = vmatpush1.msra.mxu0 0.0
    %645 = vmatprep.subr.mxu0 0.0
    %646 = vmatpush1.msra.mxu0 0.0
    %647 = vmatprep.subr.mxu0 0.0
    %648 = vmatpush1.msra.mxu0 0.0
    %649 = vmatprep.subr.mxu0 0.0
    %650 = vmatpush1.msra.mxu0 0.0
    %651 = vmatprep.subr.mxu0 0.0
    %652 = vmatpush1.msra.mxu0 0.0
    %653 = vmatprep.subr.mxu0 0.0
    %654 = vmatpush1.msra.mxu0 0.0
    %655 = vmatprep.subr.mxu0 0.0
    %656 = vmatpush1.msra.mxu0 0.0
    %657 = vmatprep.subr.mxu0 0.0
    %658 = vmatpush1.msra.mxu0 0.0
    %659 = vmatprep.subr.mxu0 0.0
    %660 = vmatpush1.msra.mxu0 0.0
    %661 = vmatprep.subr.mxu0 0.0
    %662 = vmatpush1.msra.mxu0 0.0
    %663 = vmatprep.subr.mxu0 0.0
    %664 = vmatpush1.msra.mxu0 0.0
    %665 = vmatprep.subr.mxu0 0.0
    %666 = vmatpush1.msra.mxu0 0.0
    %667 = vmatprep.subr.mxu0 0.0
    %668 = vmatpush1.msra.mxu0 0.0
    %669 = vmatprep.subr.mxu0 0.0
    %670 = vmatpush1.msra.mxu0 0.0
    %671 = vmatprep.subr.mxu0 0.0
    %672 = vmatpush1.msra.mxu0 0.0
    %673 = vmatprep.subr.mxu0 0.0
    %674 = vmatpush1.msra.mxu0 0.0
    %675 = vmatprep.subr.mxu0 0.0
    %676 = vmatpush1.msra.mxu0 0.0
    %677 = vmatprep.subr.mxu0 0.0
    %678 = vmatpush1.msra.mxu0 0.0
    %679 = vmatprep.mubr.f32.mxu0 0.0
    %680 = vmatmul.mubr.f32.gmra.mrb[0].mxu0 %v613
    %v681 = vpop.f32.mrb[0].mxu0
    %v682 = vadd.f32 %v253, %v681
    %v683 = vpop.f32.mrb[0].mxu0
    %684 = vdwg.mxu0
    %v685 = vmax.f32 %v682, 0.0
    %686 = vmatprep.subr.mxu0 0.0
    %687 = vmatpush1.msra.mxu0 %v30
    %688 = vmatprep.subr.mxu0 0.0
    %689 = vmatpush1.msra.mxu0 %v31
    %690 = vmatprep.subr.mxu0 0.0
    %691 = vmatpush1.msra.mxu0 %v32
    %692 = vmatprep.subr.mxu0 0.0
    %693 = vmatpush1.msra.mxu0 %v33
    %694 = vmatprep.subr.mxu0 0.0
    %695 = vmatpush1.msra.mxu0 0.0
    %696 = vmatprep.subr.mxu0 0.0
    %697 = vmatpush1.msra.mxu0 0.0
    %698 = vmatprep.subr.mxu0 0.0
    %699 = vmatpush1.msra.mxu0 0.0
    %700 = vmatprep.subr.mxu0 0.0
    %701 = vmatpush1.msra.mxu0 0.0
    %702 = vmatprep.subr.mxu0 0.0
    %703 = vmatpush1.msra.mxu0 0.0
    %704 = vmatprep.subr.mxu0 0.0
    %705 = vmatpush1.msra.mxu0 0.0
    %706 = vmatprep.subr.mxu0 0.0
    %707 = vmatpush1.msra.mxu0 0.0
    %708 = vmatprep.subr.mxu0 0.0
    %709 = vmatpush1.msra.mxu0 0.0
    %710 = vmatprep.subr.mxu0 0.0
    %711 = vmatpush1.msra.mxu0 0.0
    %712 = vmatprep.subr.mxu0 0.0
    %713 = vmatpush1.msra.mxu0 0.0
    %714 = vmatprep.subr.mxu0 0.0
    %715 = vmatpush1.msra.mxu0 0.0
    %716 = vmatprep.subr.mxu0 0.0
    %717 = vmatpush1.msra.mxu0 0.0
    %718 = vmatprep.subr.mxu0 0.0
    %719 = vmatpush1.msra.mxu0 0.0
    %720 = vmatprep.subr.mxu0 0.0
    %721 = vmatpush1.msra.mxu0 0.0
    %722 = vmatprep.subr.mxu0 0.0
    %723 = vmatpush1.msra.mxu0 0.0
    %724 = vmatprep.subr.mxu0 0.0
    %725 = vmatpush1.msra.mxu0 0.0
    %726 = vmatprep.subr.mxu0 0.0
    %727 = vmatpush1.msra.mxu0 0.0
    %728 = vmatprep.subr.mxu0 0.0
    %729 = vmatpush1.msra.mxu0 0.0
    %730 = vmatprep.subr.mxu0 0.0
    %731 = vmatpush1.msra.mxu0 0.0
    %732 = vmatprep.subr.mxu0 0.0
    %733 = vmatpush1.msra.mxu0 0.0
    %734 = vmatprep.subr.mxu0 0.0
    %735 = vmatpush1.msra.mxu0 0.0
    %736 = vmatprep.subr.mxu0 0.0
    %737 = vmatpush1.msra.mxu0 0.0
    %738 = vmatprep.subr.mxu0 0.0
    %739 = vmatpush1.msra.mxu0 0.0
    %740 = vmatprep.subr.mxu0 0.0
    %741 = vmatpush1.msra.mxu0 0.0
    %742 = vmatprep.subr.mxu0 0.0
    %743 = vmatpush1.msra.mxu0 0.0
    %744 = vmatprep.subr.mxu0 0.0
    %745 = vmatpush1.msra.mxu0 0.0
    %746 = vmatprep.subr.mxu0 0.0
    %747 = vmatpush1.msra.mxu0 0.0
    %748 = vmatprep.subr.mxu0 0.0
    %749 = vmatpush1.msra.mxu0 0.0
    %750 = vmatprep.mubr.f32.mxu0 0.0
    %751 = vmatmul.mubr.f32.gmra.mrb[0].mxu0 %v613
    %v752 = vpop.f32.mrb[0].mxu0
    %v753 = vadd.f32 0.0, %v752
    %v754 = vpop.f32.mrb[0].mxu0
    %755 = vdwg.mxu0
    %v757 = vrot.slane %v753, 2
    %v759 = vadd.f32 %v139, %v757
    %v760 = vxor.u32 %v759, 2147483648
    %v761 = vmul.f32 %v760, 1.442695
    %v762 = vpow.pop %v761
    %v763 = vadd.f32 %v762, 1.0
    %v764 = vrcp.pop %v763
    %v765 = vmul.f32 1.0, %v764
    %v766 = vtanh.pop %v759
    %v768 = vrot.slane %v602, 6
    %v770 = vmul.f32 %v765, %v768
    %772 = vrot.lane.b32.xlu0 %v766, 64
    %v773 = vpop.permute.xlu0 %772
    %v775 = vmul.f32 %v765, %v773
    %777 = vrot.lane.b32.xlu0 %v775, 32
    %v778 = vpop.permute.xlu0 %777
    %v780 = vadd.f32 %v770, %v778
    %v781 = vtanh.pop %v780
    %783 = vrot.lane.b32.xlu0 %v781, 64
    %v784 = vpop.permute.xlu0 %783
    %v786 = vmul.f32 %v765, %v784
    %v788 = vrot.slane %v786, 6
    %789 = vrot.lane.b32.xlu0 %v788, 32
    %v790 = vpop.permute.xlu0 %789
    %v791 = vsel %vm147, %v790, 0
    %793 = vmatprep.subr.mxu0 0.0
    %794 = vmatpush1.msra.mxu0 %v35
    %795 = vmatprep.subr.mxu0 0.0
    %796 = vmatpush1.msra.mxu0 %v36
    %797 = vmatprep.subr.mxu0 0.0
    %798 = vmatpush1.msra.mxu0 %v37
    %799 = vmatprep.subr.mxu0 0.0
    %800 = vmatpush1.msra.mxu0 %v38
    %801 = vmatprep.subr.mxu0 0.0
    %802 = vmatpush1.msra.mxu0 0.0
    %803 = vmatprep.subr.mxu0 0.0
    %804 = vmatpush1.msra.mxu0 0.0
    %805 = vmatprep.subr.mxu0 0.0
    %806 = vmatpush1.msra.mxu0 0.0
    %807 = vmatprep.subr.mxu0 0.0
    %808 = vmatpush1.msra.mxu0 0.0
    %809 = vmatprep.subr.mxu0 0.0
    %810 = vmatpush1.msra.mxu0 0.0
    %811 = vmatprep.subr.mxu0 0.0
    %812 = vmatpush1.msra.mxu0 0.0
    %813 = vmatprep.subr.mxu0 0.0
    %814 = vmatpush1.msra.mxu0 0.0
    %815 = vmatprep.subr.mxu0 0.0
    %816 = vmatpush1.msra.mxu0 0.0
    %817 = vmatprep.subr.mxu0 0.0
    %818 = vmatpush1.msra.mxu0 0.0
    %819 = vmatprep.subr.mxu0 0.0
    %820 = vmatpush1.msra.mxu0 0.0
    %821 = vmatprep.subr.mxu0 0.0
    %822 = vmatpush1.msra.mxu0 0.0
    %823 = vmatprep.subr.mxu0 0.0
    %824 = vmatpush1.msra.mxu0 0.0
    %825 = vmatprep.subr.mxu0 0.0
    %826 = vmatpush1.msra.mxu0 0.0
    %827 = vmatprep.subr.mxu0 0.0
    %828 = vmatpush1.msra.mxu0 0.0
    %829 = vmatprep.subr.mxu0 0.0
    %830 = vmatpush1.msra.mxu0 0.0
    %831 = vmatprep.subr.mxu0 0.0
    %832 = vmatpush1.msra.mxu0 0.0
    %833 = vmatprep.subr.mxu0 0.0
    %834 = vmatpush1.msra.mxu0 0.0
    %835 = vmatprep.subr.mxu0 0.0
    %836 = vmatpush1.msra.mxu0 0.0
    %837 = vmatprep.subr.mxu0 0.0
    %838 = vmatpush1.msra.mxu0 0.0
    %839 = vmatprep.subr.mxu0 0.0
    %840 = vmatpush1.msra.mxu0 0.0
    %841 = vmatprep.subr.mxu0 0.0
    %842 = vmatpush1.msra.mxu0 0.0
    %843 = vmatprep.subr.mxu0 0.0
    %844 = vmatpush1.msra.mxu0 0.0
    %845 = vmatprep.subr.mxu0 0.0
    %846 = vmatpush1.msra.mxu0 0.0
    %847 = vmatprep.subr.mxu0 0.0
    %848 = vmatpush1.msra.mxu0 0.0
    %849 = vmatprep.subr.mxu0 0.0
    %850 = vmatpush1.msra.mxu0 0.0
    %851 = vmatprep.subr.mxu0 0.0
    %852 = vmatpush1.msra.mxu0 0.0
    %853 = vmatprep.subr.mxu0 0.0
    %854 = vmatpush1.msra.mxu0 0.0
    %855 = vmatprep.subr.mxu0 0.0
    %856 = vmatpush1.msra.mxu0 0.0
    %857 = vmatprep.mubr.f32.mxu0 0.0
    %858 = vmatmul.mubr.f32.gmra.mrb[0].mxu0 %v791
    %v859 = vpop.f32.mrb[0].mxu0
    %v860 = vadd.f32 %v253, %v859
    %v861 = vpop.f32.mrb[0].mxu0
    %862 = vdwg.mxu0
    %v863 = vmax.f32 %v860, 0.0
    %864 = vmatprep.subr.mxu0 0.0
    %865 = vmatpush1.msra.mxu0 %v30
    %866 = vmatprep.subr.mxu0 0.0
    %867 = vmatpush1.msra.mxu0 %v31
    %868 = vmatprep.subr.mxu0 0.0
    %869 = vmatpush1.msra.mxu0 %v32
    %870 = vmatprep.subr.mxu0 0.0
    %871 = vmatpush1.msra.mxu0 %v33
    %872 = vmatprep.subr.mxu0 0.0
    %873 = vmatpush1.msra.mxu0 0.0
    %874 = vmatprep.subr.mxu0 0.0
    %875 = vmatpush1.msra.mxu0 0.0
    %876 = vmatprep.subr.mxu0 0.0
    %877 = vmatpush1.msra.mxu0 0.0
    %878 = vmatprep.subr.mxu0 0.0
    %879 = vmatpush1.msra.mxu0 0.0
    %880 = vmatprep.subr.mxu0 0.0
    %881 = vmatpush1.msra.mxu0 0.0
    %882 = vmatprep.subr.mxu0 0.0
    %883 = vmatpush1.msra.mxu0 0.0
    %884 = vmatprep.subr.mxu0 0.0
    %885 = vmatpush1.msra.mxu0 0.0
    %886 = vmatprep.subr.mxu0 0.0
    %887 = vmatpush1.msra.mxu0 0.0
    %888 = vmatprep.subr.mxu0 0.0
    %889 = vmatpush1.msra.mxu0 0.0
    %890 = vmatprep.subr.mxu0 0.0
    %891 = vmatpush1.msra.mxu0 0.0
    %892 = vmatprep.subr.mxu0 0.0
    %893 = vmatpush1.msra.mxu0 0.0
    %894 = vmatprep.subr.mxu0 0.0
    %895 = vmatpush1.msra.mxu0 0.0
    %896 = vmatprep.subr.mxu0 0.0
    %897 = vmatpush1.msra.mxu0 0.0
    %898 = vmatprep.subr.mxu0 0.0
    %899 = vmatpush1.msra.mxu0 0.0
    %900 = vmatprep.subr.mxu0 0.0
    %901 = vmatpush1.msra.mxu0 0.0
    %902 = vmatprep.subr.mxu0 0.0
    %903 = vmatpush1.msra.mxu0 0.0
    %904 = vmatprep.subr.mxu0 0.0
    %905 = vmatpush1.msra.mxu0 0.0
    %906 = vmatprep.subr.mxu0 0.0
    %907 = vmatpush1.msra.mxu0 0.0
    %908 = vmatprep.subr.mxu0 0.0
    %909 = vmatpush1.msra.mxu0 0.0
    %910 = vmatprep.subr.mxu0 0.0
    %911 = vmatpush1.msra.mxu0 0.0
    %912 = vmatprep.subr.mxu0 0.0
    %913 = vmatpush1.msra.mxu0 0.0
    %914 = vmatprep.subr.mxu0 0.0
    %915 = vmatpush1.msra.mxu0 0.0
    %916 = vmatprep.subr.mxu0 0.0
    %917 = vmatpush1.msra.mxu0 0.0
    %918 = vmatprep.subr.mxu0 0.0
    %919 = vmatpush1.msra.mxu0 0.0
    %920 = vmatprep.subr.mxu0 0.0
    %921 = vmatpush1.msra.mxu0 0.0
    %922 = vmatprep.subr.mxu0 0.0
    %923 = vmatpush1.msra.mxu0 0.0
    %924 = vmatprep.subr.mxu0 0.0
    %925 = vmatpush1.msra.mxu0 0.0
    %926 = vmatprep.subr.mxu0 0.0
    %927 = vmatpush1.msra.mxu0 0.0
    %928 = vmatprep.mubr.f32.mxu0 0.0
    %929 = vmatmul.mubr.f32.gmra.mrb[0].mxu0 %v791
    %v930 = vpop.f32.mrb[0].mxu0
    %v931 = vadd.f32 0.0, %v930
    %v932 = vpop.f32.mrb[0].mxu0
    %933 = vdwg.mxu0
    %v934 = vadd.f32 %v144, %v931
    %v935 = vxor.u32 %v934, 2147483648
    %v936 = vmul.f32 %v935, 1.442695
    %v937 = vpow.pop %v936
    %v938 = vadd.f32 %v937, 1.0
    %v939 = vrcp.pop %v938
    %v940 = vmul.f32 1.0, %v939
    %v941 = vtanh.pop %v934
    %v943 = vrot.slane %v780, 6
    %v945 = vmul.f32 %v940, %v943
    %947 = vrot.lane.b32.xlu0 %v941, 64
    %v948 = vpop.permute.xlu0 %947
    %v950 = vmul.f32 %v940, %v948
    %952 = vrot.lane.b32.xlu0 %v950, 32
    %v953 = vpop.permute.xlu0 %952
    %v955 = vadd.f32 %v945, %v953
    %v956 = vtanh.pop %v955
    %958 = vrot.lane.b32.xlu0 %v956, 64
    %v959 = vpop.permute.xlu0 %958
    %v961 = vmul.f32 %v940, %v959
    %963 = vrot.lane.b32.xlu0 %v961, 32
    %v964 = vpop.permute.xlu0 %963
    %v965 = vsel %vm147, %v964, 0
    %967 = vmatprep.subr.mxu0 0.0
    %968 = vmatpush1.msra.mxu0 %v35
    %969 = vmatprep.subr.mxu0 0.0
    %970 = vmatpush1.msra.mxu0 %v36
    %971 = vmatprep.subr.mxu0 0.0
    %972 = vmatpush1.msra.mxu0 %v37
    %973 = vmatprep.subr.mxu0 0.0
    %974 = vmatpush1.msra.mxu0 %v38
    %975 = vmatprep.subr.mxu0 0.0
    %976 = vmatpush1.msra.mxu0 0.0
    %977 = vmatprep.subr.mxu0 0.0
    %978 = vmatpush1.msra.mxu0 0.0
    %979 = vmatprep.subr.mxu0 0.0
    %980 = vmatpush1.msra.mxu0 0.0
    %981 = vmatprep.subr.mxu0 0.0
    %982 = vmatpush1.msra.mxu0 0.0
    %983 = vmatprep.subr.mxu0 0.0
    %984 = vmatpush1.msra.mxu0 0.0
    %985 = vmatprep.subr.mxu0 0.0
    %986 = vmatpush1.msra.mxu0 0.0
    %987 = vmatprep.subr.mxu0 0.0
    %988 = vmatpush1.msra.mxu0 0.0
    %989 = vmatprep.subr.mxu0 0.0
    %990 = vmatpush1.msra.mxu0 0.0
    %991 = vmatprep.subr.mxu0 0.0
    %992 = vmatpush1.msra.mxu0 0.0
    %993 = vmatprep.subr.mxu0 0.0
    %994 = vmatpush1.msra.mxu0 0.0
    %995 = vmatprep.subr.mxu0 0.0
    %996 = vmatpush1.msra.mxu0 0.0
    %997 = vmatprep.subr.mxu0 0.0
    %998 = vmatpush1.msra.mxu0 0.0
    %999 = vmatprep.subr.mxu0 0.0
    %1000 = vmatpush1.msra.mxu0 0.0
    %1001 = vmatprep.subr.mxu0 0.0
    %1002 = vmatpush1.msra.mxu0 0.0
    %1003 = vmatprep.subr.mxu0 0.0
    %1004 = vmatpush1.msra.mxu0 0.0
    %1005 = vmatprep.subr.mxu0 0.0
    %1006 = vmatpush1.msra.mxu0 0.0
    %1007 = vmatprep.subr.mxu0 0.0
    %1008 = vmatpush1.msra.mxu0 0.0
    %1009 = vmatprep.subr.mxu0 0.0
    %1010 = vmatpush1.msra.mxu0 0.0
    %1011 = vmatprep.subr.mxu0 0.0
    %1012 = vmatpush1.msra.mxu0 0.0
    %1013 = vmatprep.subr.mxu0 0.0
    %1014 = vmatpush1.msra.mxu0 0.0
    %1015 = vmatprep.subr.mxu0 0.0
    %1016 = vmatpush1.msra.mxu0 0.0
    %1017 = vmatprep.subr.mxu0 0.0
    %1018 = vmatpush1.msra.mxu0 0.0
    %1019 = vmatprep.subr.mxu0 0.0
    %1020 = vmatpush1.msra.mxu0 0.0
    %1021 = vmatprep.subr.mxu0 0.0
    %1022 = vmatpush1.msra.mxu0 0.0
    %1023 = vmatprep.subr.mxu0 0.0
    %1024 = vmatpush1.msra.mxu0 0.0
    %1025 = vmatprep.subr.mxu0 0.0
    %1026 = vmatpush1.msra.mxu0 0.0
    %1027 = vmatprep.subr.mxu0 0.0
    %1028 = vmatpush1.msra.mxu0 0.0
    %1029 = vmatprep.subr.mxu0 0.0
    %1030 = vmatpush1.msra.mxu0 0.0
    %1031 = vmatprep.mubr.f32.mxu0 0.0
    %1032 = vmatmul.mubr.f32.gmra.mrb[0].mxu0 %v965
    %v1033 = vpop.f32.mrb[0].mxu0
    %v1034 = vadd.f32 %v253, %v1033
    %v1035 = vpop.f32.mrb[0].mxu0
    %1036 = vdwg.mxu0
    %v1037 = vmax.f32 %v1034, 0.0
    %1038 = vmatprep.subr.mxu0 0.0
    %1039 = vmatpush1.msra.mxu0 %v30
    %1040 = vmatprep.subr.mxu0 0.0
    %1041 = vmatpush1.msra.mxu0 %v31
    %1042 = vmatprep.subr.mxu0 0.0
    %1043 = vmatpush1.msra.mxu0 %v32
    %1044 = vmatprep.subr.mxu0 0.0
    %1045 = vmatpush1.msra.mxu0 %v33
    %1046 = vmatprep.subr.mxu0 0.0
    %1047 = vmatpush1.msra.mxu0 0.0
    %1048 = vmatprep.subr.mxu0 0.0
    %1049 = vmatpush1.msra.mxu0 0.0
    %1050 = vmatprep.subr.mxu0 0.0
    %1051 = vmatpush1.msra.mxu0 0.0
    %1052 = vmatprep.subr.mxu0 0.0
    %1053 = vmatpush1.msra.mxu0 0.0
    %1054 = vmatprep.subr.mxu0 0.0
    %1055 = vmatpush1.msra.mxu0 0.0
    %1056 = vmatprep.subr.mxu0 0.0
    %1057 = vmatpush1.msra.mxu0 0.0
    %1058 = vmatprep.subr.mxu0 0.0
    %1059 = vmatpush1.msra.mxu0 0.0
    %1060 = vmatprep.subr.mxu0 0.0
    %1061 = vmatpush1.msra.mxu0 0.0
    %1062 = vmatprep.subr.mxu0 0.0
    %1063 = vmatpush1.msra.mxu0 0.0
    %1064 = vmatprep.subr.mxu0 0.0
    %1065 = vmatpush1.msra.mxu0 0.0
    %1066 = vmatprep.subr.mxu0 0.0
    %1067 = vmatpush1.msra.mxu0 0.0
    %1068 = vmatprep.subr.mxu0 0.0
    %1069 = vmatpush1.msra.mxu0 0.0
    %1070 = vmatprep.subr.mxu0 0.0
    %1071 = vmatpush1.msra.mxu0 0.0
    %1072 = vmatprep.subr.mxu0 0.0
    %1073 = vmatpush1.msra.mxu0 0.0
    %1074 = vmatprep.subr.mxu0 0.0
    %1075 = vmatpush1.msra.mxu0 0.0
    %1076 = vmatprep.subr.mxu0 0.0
    %1077 = vmatpush1.msra.mxu0 0.0
    %1078 = vmatprep.subr.mxu0 0.0
    %1079 = vmatpush1.msra.mxu0 0.0
    %1080 = vmatprep.subr.mxu0 0.0
    %1081 = vmatpush1.msra.mxu0 0.0
    %1082 = vmatprep.subr.mxu0 0.0
    %1083 = vmatpush1.msra.mxu0 0.0
    %1084 = vmatprep.subr.mxu0 0.0
    %1085 = vmatpush1.msra.mxu0 0.0
    %1086 = vmatprep.subr.mxu0 0.0
    %1087 = vmatpush1.msra.mxu0 0.0
    %1088 = vmatprep.subr.mxu0 0.0
    %1089 = vmatpush1.msra.mxu0 0.0
    %1090 = vmatprep.subr.mxu0 0.0
    %1091 = vmatpush1.msra.mxu0 0.0
    %1092 = vmatprep.subr.mxu0 0.0
    %1093 = vmatpush1.msra.mxu0 0.0
    %1094 = vmatprep.subr.mxu0 0.0
    %1095 = vmatpush1.msra.mxu0 0.0
    %1096 = vmatprep.subr.mxu0 0.0
    %1097 = vmatpush1.msra.mxu0 0.0
    %1098 = vmatprep.subr.mxu0 0.0
    %1099 = vmatpush1.msra.mxu0 0.0
    %1100 = vmatprep.subr.mxu0 0.0
    %1101 = vmatpush1.msra.mxu0 0.0
    %1102 = vmatprep.mubr.f32.mxu0 0.0
    %1103 = vmatmul.mubr.f32.gmra.mrb[0].mxu0 %v965
    %v1104 = vpop.f32.mrb[0].mxu0
    %v1105 = vadd.f32 0.0, %v1104
    %v1106 = vpop.f32.mrb[0].mxu0
    %1107 = vdwg.mxu0
    %v1109 = vrot.slane %v1105, 6
    %v1111 = vadd.f32 %v144, %v1109
    %v1112 = vxor.u32 %v1111, 2147483648
    %v1113 = vmul.f32 %v1112, 1.442695
    %v1114 = vpow.pop %v1113
    %v1115 = vadd.f32 %v1114, 1.0
    %v1116 = vrcp.pop %v1115
    %v1117 = vmul.f32 1.0, %v1116
    %v1118 = vtanh.pop %v1111
    %v1120 = vrot.slane %v955, 6
    %v1122 = vmul.f32 %v1117, %v1120
    %1124 = vrot.lane.b32.xlu0 %v1118, 64
    %v1125 = vpop.permute.xlu0 %1124
    %v1127 = vmul.f32 %v1117, %v1125
    %1129 = vrot.lane.b32.xlu0 %v1127, 32
    %v1130 = vpop.permute.xlu0 %1129
    %v1132 = vadd.f32 %v1122, %v1130
    %v1133 = vtanh.pop %v1132
    %1135 = vrot.lane.b32.xlu0 %v1133, 64
    %v1136 = vpop.permute.xlu0 %1135
    %v1138 = vmul.f32 %v1117, %v1136
    %v1140 = vrot.slane %v1138, 2
    %1141 = vrot.lane.b32.xlu0 %v1140, 32
    %v1142 = vpop.permute.xlu0 %1141
    %v1143 = vsel %vm147, %v1142, 0
    %1145 = vmatprep.subr.mxu0 0.0
    %1146 = vmatpush1.msra.mxu0 %v35
    %1147 = vmatprep.subr.mxu0 0.0
    %1148 = vmatpush1.msra.mxu0 %v36
    %1149 = vmatprep.subr.mxu0 0.0
    %1150 = vmatpush1.msra.mxu0 %v37
    %1151 = vmatprep.subr.mxu0 0.0
    %1152 = vmatpush1.msra.mxu0 %v38
    %1153 = vmatprep.subr.mxu0 0.0
    %1154 = vmatpush1.msra.mxu0 0.0
    %1155 = vmatprep.subr.mxu0 0.0
    %1156 = vmatpush1.msra.mxu0 0.0
    %1157 = vmatprep.subr.mxu0 0.0
    %1158 = vmatpush1.msra.mxu0 0.0
    %1159 = vmatprep.subr.mxu0 0.0
    %1160 = vmatpush1.msra.mxu0 0.0
    %1161 = vmatprep.subr.mxu0 0.0
    %1162 = vmatpush1.msra.mxu0 0.0
    %1163 = vmatprep.subr.mxu0 0.0
    %1164 = vmatpush1.msra.mxu0 0.0
    %1165 = vmatprep.subr.mxu0 0.0
    %1166 = vmatpush1.msra.mxu0 0.0
    %1167 = vmatprep.subr.mxu0 0.0
    %1168 = vmatpush1.msra.mxu0 0.0
    %1169 = vmatprep.subr.mxu0 0.0
    %1170 = vmatpush1.msra.mxu0 0.0
    %1171 = vmatprep.subr.mxu0 0.0
    %1172 = vmatpush1.msra.mxu0 0.0
    %1173 = vmatprep.subr.mxu0 0.0
    %1174 = vmatpush1.msra.mxu0 0.0
    %1175 = vmatprep.subr.mxu0 0.0
    %1176 = vmatpush1.msra.mxu0 0.0
    %1177 = vmatprep.subr.mxu0 0.0
    %1178 = vmatpush1.msra.mxu0 0.0
    %1179 = vmatprep.subr.mxu0 0.0
    %1180 = vmatpush1.msra.mxu0 0.0
    %1181 = vmatprep.subr.mxu0 0.0
    %1182 = vmatpush1.msra.mxu0 0.0
    %1183 = vmatprep.subr.mxu0 0.0
    %1184 = vmatpush1.msra.mxu0 0.0
    %1185 = vmatprep.subr.mxu0 0.0
    %1186 = vmatpush1.msra.mxu0 0.0
    %1187 = vmatprep.subr.mxu0 0.0
    %1188 = vmatpush1.msra.mxu0 0.0
    %1189 = vmatprep.subr.mxu0 0.0
    %1190 = vmatpush1.msra.mxu0 0.0
    %1191 = vmatprep.subr.mxu0 0.0
    %1192 = vmatpush1.msra.mxu0 0.0
    %1193 = vmatprep.subr.mxu0 0.0
    %1194 = vmatpush1.msra.mxu0 0.0
    %1195 = vmatprep.subr.mxu0 0.0
    %1196 = vmatpush1.msra.mxu0 0.0
    %1197 = vmatprep.subr.mxu0 0.0
    %1198 = vmatpush1.msra.mxu0 0.0
    %1199 = vmatprep.subr.mxu0 0.0
    %1200 = vmatpush1.msra.mxu0 0.0
    %1201 = vmatprep.subr.mxu0 0.0
    %1202 = vmatpush1.msra.mxu0 0.0
    %1203 = vmatprep.subr.mxu0 0.0
    %1204 = vmatpush1.msra.mxu0 0.0
    %1205 = vmatprep.subr.mxu0 0.0
    %1206 = vmatpush1.msra.mxu0 0.0
    %1207 = vmatprep.subr.mxu0 0.0
    %1208 = vmatpush1.msra.mxu0 0.0
    %1209 = vmatprep.mubr.f32.mxu0 0.0
    %1210 = vmatmul.mubr.f32.gmra.mrb[0].mxu0 %v1143
    %v1211 = vpop.f32.mrb[0].mxu0
    %v1212 = vadd.f32 %v253, %v1211
    %v1213 = vpop.f32.mrb[0].mxu0
    %1214 = vdwg.mxu0
    %v1215 = vmax.f32 %v1212, 0.0
    %1216 = vmatprep.subr.mxu0 0.0
    %1217 = vmatpush1.msra.mxu0 %v30
    %1218 = vmatprep.subr.mxu0 0.0
    %1219 = vmatpush1.msra.mxu0 %v31
    %1220 = vmatprep.subr.mxu0 0.0
    %1221 = vmatpush1.msra.mxu0 %v32
    %1222 = vmatprep.subr.mxu0 0.0
    %1223 = vmatpush1.msra.mxu0 %v33
    %1224 = vmatprep.subr.mxu0 0.0
    %1225 = vmatpush1.msra.mxu0 0.0
    %1226 = vmatprep.subr.mxu0 0.0
    %1227 = vmatpush1.msra.mxu0 0.0
    %1228 = vmatprep.subr.mxu0 0.0
    %1229 = vmatpush1.msra.mxu0 0.0
    %1230 = vmatprep.subr.mxu0 0.0
    %1231 = vmatpush1.msra.mxu0 0.0
    %1232 = vmatprep.subr.mxu0 0.0
    %1233 = vmatpush1.msra.mxu0 0.0
    %1234 = vmatprep.subr.mxu0 0.0
    %1235 = vmatpush1.msra.mxu0 0.0
    %1236 = vmatprep.subr.mxu0 0.0
    %1237 = vmatpush1.msra.mxu0 0.0
    %1238 = vmatprep.subr.mxu0 0.0
    %1239 = vmatpush1.msra.mxu0 0.0
    %1240 = vmatprep.subr.mxu0 0.0
    %1241 = vmatpush1.msra.mxu0 0.0
    %1242 = vmatprep.subr.mxu0 0.0
    %1243 = vmatpush1.msra.mxu0 0.0
    %1244 = vmatprep.subr.mxu0 0.0
    %1245 = vmatpush1.msra.mxu0 0.0
    %1246 = vmatprep.subr.mxu0 0.0
    %1247 = vmatpush1.msra.mxu0 0.0
    %1248 = vmatprep.subr.mxu0 0.0
    %1249 = vmatpush1.msra.mxu0 0.0
    %1250 = vmatprep.subr.mxu0 0.0
    %1251 = vmatpush1.msra.mxu0 0.0
    %1252 = vmatprep.subr.mxu0 0.0
    %1253 = vmatpush1.msra.mxu0 0.0
    %1254 = vmatprep.subr.mxu0 0.0
    %1255 = vmatpush1.msra.mxu0 0.0
    %1256 = vmatprep.subr.mxu0 0.0
    %1257 = vmatpush1.msra.mxu0 0.0
    %1258 = vmatprep.subr.mxu0 0.0
    %1259 = vmatpush1.msra.mxu0 0.0
    %1260 = vmatprep.subr.mxu0 0.0
    %1261 = vmatpush1.msra.mxu0 0.0
    %1262 = vmatprep.subr.mxu0 0.0
    %1263 = vmatpush1.msra.mxu0 0.0
    %1264 = vmatprep.subr.mxu0 0.0
    %1265 = vmatpush1.msra.mxu0 0.0
    %1266 = vmatprep.subr.mxu0 0.0
    %1267 = vmatpush1.msra.mxu0 0.0
    %1268 = vmatprep.subr.mxu0 0.0
    %1269 = vmatpush1.msra.mxu0 0.0
    %1270 = vmatprep.subr.mxu0 0.0
    %1271 = vmatpush1.msra.mxu0 0.0
    %1272 = vmatprep.subr.mxu0 0.0
    %1273 = vmatpush1.msra.mxu0 0.0
    %1274 = vmatprep.subr.mxu0 0.0
    %1275 = vmatpush1.msra.mxu0 0.0
    %1276 = vmatprep.subr.mxu0 0.0
    %1277 = vmatpush1.msra.mxu0 0.0
    %1278 = vmatprep.subr.mxu0 0.0
    %1279 = vmatpush1.msra.mxu0 0.0
    %1280 = vmatprep.mubr.f32.mxu0 0.0
    %1281 = vmatmul.mubr.f32.gmra.mrb[0].mxu0 %v1143
    %v1282 = vpop.f32.mrb[0].mxu0
    %v1283 = vadd.f32 0.0, %v1282
    %v1284 = vpop.f32.mrb[0].mxu0
    %1285 = vdwg.mxu0
    %v1287 = vrot.slane %v1283, 4
    %v1289 = vadd.f32 %v144, %v1287
    %v1290 = vxor.u32 %v1289, 2147483648
    %v1291 = vmul.f32 %v1290, 1.442695
    %v1292 = vpow.pop %v1291
    %v1293 = vadd.f32 %v1292, 1.0
    %v1294 = vrcp.pop %v1293
    %v1295 = vmul.f32 1.0, %v1294
    %v1296 = vtanh.pop %v1289
    %v1298 = vrot.slane %v1132, 6
    %v1300 = vmul.f32 %v1295, %v1298
    %1302 = vrot.lane.b32.xlu0 %v1296, 64
    %v1303 = vpop.permute.xlu0 %1302
    %v1305 = vmul.f32 %v1295, %v1303
    %1307 = vrot.lane.b32.xlu0 %v1305, 32
    %v1308 = vpop.permute.xlu0 %1307
    %v1310 = vadd.f32 %v1300, %v1308
    %v1311 = vtanh.pop %v1310
    %1313 = vrot.lane.b32.xlu0 %v1311, 64
    %v1314 = vpop.permute.xlu0 %1313
    %v1316 = vmul.f32 %v1295, %v1314
    %v1318 = vrot.slane %v1316, 4
    %1319 = vrot.lane.b32.xlu0 %v1318, 32
    %v1320 = vpop.permute.xlu0 %1319
    %v1321 = vsel %vm147, %v1320, 0
    %1323 = vmatprep.subr.mxu0 0.0
    %1324 = vmatpush1.msra.mxu0 %v35
    %1325 = vmatprep.subr.mxu0 0.0
    %1326 = vmatpush1.msra.mxu0 %v36
    %1327 = vmatprep.subr.mxu0 0.0
    %1328 = vmatpush1.msra.mxu0 %v37
    %1329 = vmatprep.subr.mxu0 0.0
    %1330 = vmatpush1.msra.mxu0 %v38
    %1331 = vmatprep.subr.mxu0 0.0
    %1332 = vmatpush1.msra.mxu0 0.0
    %1333 = vmatprep.subr.mxu0 0.0
    %1334 = vmatpush1.msra.mxu0 0.0
    %1335 = vmatprep.subr.mxu0 0.0
    %1336 = vmatpush1.msra.mxu0 0.0
    %1337 = vmatprep.subr.mxu0 0.0
    %1338 = vmatpush1.msra.mxu0 0.0
    %1339 = vmatprep.subr.mxu0 0.0
    %1340 = vmatpush1.msra.mxu0 0.0
    %1341 = vmatprep.subr.mxu0 0.0
    %1342 = vmatpush1.msra.mxu0 0.0
    %1343 = vmatprep.subr.mxu0 0.0
    %1344 = vmatpush1.msra.mxu0 0.0
    %1345 = vmatprep.subr.mxu0 0.0
    %1346 = vmatpush1.msra.mxu0 0.0
    %1347 = vmatprep.subr.mxu0 0.0
    %1348 = vmatpush1.msra.mxu0 0.0
    %1349 = vmatprep.subr.mxu0 0.0
    %1350 = vmatpush1.msra.mxu0 0.0
    %1351 = vmatprep.subr.mxu0 0.0
    %1352 = vmatpush1.msra.mxu0 0.0
    %1353 = vmatprep.subr.mxu0 0.0
    %1354 = vmatpush1.msra.mxu0 0.0
    %1355 = vmatprep.subr.mxu0 0.0
    %1356 = vmatpush1.msra.mxu0 0.0
    %1357 = vmatprep.subr.mxu0 0.0
    %1358 = vmatpush1.msra.mxu0 0.0
    %1359 = vmatprep.subr.mxu0 0.0
    %1360 = vmatpush1.msra.mxu0 0.0
    %1361 = vmatprep.subr.mxu0 0.0
    %1362 = vmatpush1.msra.mxu0 0.0
    %1363 = vmatprep.subr.mxu0 0.0
    %1364 = vmatpush1.msra.mxu0 0.0
    %1365 = vmatprep.subr.mxu0 0.0
    %1366 = vmatpush1.msra.mxu0 0.0
    %1367 = vmatprep.subr.mxu0 0.0
    %1368 = vmatpush1.msra.mxu0 0.0
    %1369 = vmatprep.subr.mxu0 0.0
    %1370 = vmatpush1.msra.mxu0 0.0
    %1371 = vmatprep.subr.mxu0 0.0
    %1372 = vmatpush1.msra.mxu0 0.0
    %1373 = vmatprep.subr.mxu0 0.0
    %1374 = vmatpush1.msra.mxu0 0.0
    %1375 = vmatprep.subr.mxu0 0.0
    %1376 = vmatpush1.msra.mxu0 0.0
    %1377 = vmatprep.subr.mxu0 0.0
    %1378 = vmatpush1.msra.mxu0 0.0
    %1379 = vmatprep.subr.mxu0 0.0
    %1380 = vmatpush1.msra.mxu0 0.0
    %1381 = vmatprep.subr.mxu0 0.0
    %1382 = vmatpush1.msra.mxu0 0.0
    %1383 = vmatprep.subr.mxu0 0.0
    %1384 = vmatpush1.msra.mxu0 0.0
    %1385 = vmatprep.subr.mxu0 0.0
    %1386 = vmatpush1.msra.mxu0 0.0
    %1387 = vmatprep.mubr.f32.mxu0 0.0
    %1388 = vmatmul.mubr.f32.gmra.mrb[0].mxu0 %v1321
    %v1389 = vpop.f32.mrb[0].mxu0
    %v1390 = vadd.f32 %v253, %v1389
    %v1391 = vpop.f32.mrb[0].mxu0
    %1392 = vdwg.mxu0
    %v1393 = vmax.f32 %v1390, 0.0
    %1394 = vmatprep.subr.mxu0 0.0
    %1395 = vmatpush1.msra.mxu0 %v30
    %1396 = vmatprep.subr.mxu0 0.0
    %1397 = vmatpush1.msra.mxu0 %v31
    %1398 = vmatprep.subr.mxu0 0.0
    %1399 = vmatpush1.msra.mxu0 %v32
    %1400 = vmatprep.subr.mxu0 0.0
    %1401 = vmatpush1.msra.mxu0 %v33
    %1402 = vmatprep.subr.mxu0 0.0
    %1403 = vmatpush1.msra.mxu0 0.0
    %1404 = vmatprep.subr.mxu0 0.0
    %1405 = vmatpush1.msra.mxu0 0.0
    %1406 = vmatprep.subr.mxu0 0.0
    %1407 = vmatpush1.msra.mxu0 0.0
    %1408 = vmatprep.subr.mxu0 0.0
    %1409 = vmatpush1.msra.mxu0 0.0
    %1410 = vmatprep.subr.mxu0 0.0
    %1411 = vmatpush1.msra.mxu0 0.0
    %1412 = vmatprep.subr.mxu0 0.0
    %1413 = vmatpush1.msra.mxu0 0.0
    %1414 = vmatprep.subr.mxu0 0.0
    %1415 = vmatpush1.msra.mxu0 0.0
    %1416 = vmatprep.subr.mxu0 0.0
    %1417 = vmatpush1.msra.mxu0 0.0
    %1418 = vmatprep.subr.mxu0 0.0
    %1419 = vmatpush1.msra.mxu0 0.0
    %1420 = vmatprep.subr.mxu0 0.0
    %1421 = vmatpush1.msra.mxu0 0.0
    %1422 = vmatprep.subr.mxu0 0.0
    %1423 = vmatpush1.msra.mxu0 0.0
    %1424 = vmatprep.subr.mxu0 0.0
    %1425 = vmatpush1.msra.mxu0 0.0
    %1426 = vmatprep.subr.mxu0 0.0
    %1427 = vmatpush1.msra.mxu0 0.0
    %1428 = vmatprep.subr.mxu0 0.0
    %1429 = vmatpush1.msra.mxu0 0.0
    %1430 = vmatprep.subr.mxu0 0.0
    %1431 = vmatpush1.msra.mxu0 0.0
    %1432 = vmatprep.subr.mxu0 0.0
    %1433 = vmatpush1.msra.mxu0 0.0
    %1434 = vmatprep.subr.mxu0 0.0
    %1435 = vmatpush1.msra.mxu0 0.0
    %1436 = vmatprep.subr.mxu0 0.0
    %1437 = vmatpush1.msra.mxu0 0.0
    %1438 = vmatprep.subr.mxu0 0.0
    %1439 = vmatpush1.msra.mxu0 0.0
    %1440 = vmatprep.subr.mxu0 0.0
    %1441 = vmatpush1.msra.mxu0 0.0
    %1442 = vmatprep.subr.mxu0 0.0
    %1443 = vmatpush1.msra.mxu0 0.0
    %1444 = vmatprep.subr.mxu0 0.0
    %1445 = vmatpush1.msra.mxu0 0.0
    %1446 = vmatprep.subr.mxu0 0.0
    %1447 = vmatpush1.msra.mxu0 0.0
    %1448 = vmatprep.subr.mxu0 0.0
    %1449 = vmatpush1.msra.mxu0 0.0
    %1450 = vmatprep.subr.mxu0 0.0
    %1451 = vmatpush1.msra.mxu0 0.0
    %1452 = vmatprep.subr.mxu0 0.0
    %1453 = vmatpush1.msra.mxu0 0.0
    %1454 = vmatprep.subr.mxu0 0.0
    %1455 = vmatpush1.msra.mxu0 0.0
    %1456 = vmatprep.subr.mxu0 0.0
    %1457 = vmatpush1.msra.mxu0 0.0
    %1458 = vmatprep.mubr.f32.mxu0 0.0
    %1459 = vmatmul.mubr.f32.gmra.mrb[0].mxu0 %v1321
    %v1460 = vpop.f32.mrb[0].mxu0
    %v1461 = vadd.f32 0.0, %v1460
    %v1462 = vpop.f32.mrb[0].mxu0
    %1463 = vdwg.mxu0
    %v1465 = vrot.slane %v1461, 2
    %v1467 = vadd.f32 %v144, %v1465
    %v1468 = vxor.u32 %v1467, 2147483648
    %v1469 = vmul.f32 %v1468, 1.442695
    %v1470 = vpow.pop %v1469
    %v1471 = vadd.f32 %v1470, 1.0
    %v1472 = vrcp.pop %v1471
    %v1473 = vmul.f32 1.0, %v1472
    %v1474 = vtanh.pop %v1467
    %v1476 = vrot.slane %v1310, 6
    %v1478 = vmul.f32 %v1473, %v1476
    %1480 = vrot.lane.b32.xlu0 %v1474, 64
    %v1481 = vpop.permute.xlu0 %1480
    %v1483 = vmul.f32 %v1473, %v1481
    %1485 = vrot.lane.b32.xlu0 %v1483, 32
    %v1486 = vpop.permute.xlu0 %1485
    %v1488 = vadd.f32 %v1478, %v1486
    %v1489 = vtanh.pop %v1488
    %1491 = vrot.lane.b32.xlu0 %v1489, 64
    %v1492 = vpop.permute.xlu0 %1491
    %v1494 = vmul.f32 %v1473, %v1492
    %v1496 = vrot.slane %v1494, 6
    %1497 = vrot.lane.b32.xlu0 %v1496, 32
    %v1498 = vpop.permute.xlu0 %1497
    %v1499 = vsel %vm147, %v1498, 0
    %1501 = vmatprep.subr.mxu0 0.0
    %1502 = vmatpush1.msra.mxu0 %v35
    %1503 = vmatprep.subr.mxu0 0.0
    %1504 = vmatpush1.msra.mxu0 %v36
    %1505 = vmatprep.subr.mxu0 0.0
    %1506 = vmatpush1.msra.mxu0 %v37
    %1507 = vmatprep.subr.mxu0 0.0
    %1508 = vmatpush1.msra.mxu0 %v38
    %1509 = vmatprep.subr.mxu0 0.0
    %1510 = vmatpush1.msra.mxu0 0.0
    %1511 = vmatprep.subr.mxu0 0.0
    %1512 = vmatpush1.msra.mxu0 0.0
    %1513 = vmatprep.subr.mxu0 0.0
    %1514 = vmatpush1.msra.mxu0 0.0
    %1515 = vmatprep.subr.mxu0 0.0
    %1516 = vmatpush1.msra.mxu0 0.0
    %1517 = vmatprep.subr.mxu0 0.0
    %1518 = vmatpush1.msra.mxu0 0.0
    %1519 = vmatprep.subr.mxu0 0.0
    %1520 = vmatpush1.msra.mxu0 0.0
    %1521 = vmatprep.subr.mxu0 0.0
    %1522 = vmatpush1.msra.mxu0 0.0
    %1523 = vmatprep.subr.mxu0 0.0
    %1524 = vmatpush1.msra.mxu0 0.0
    %1525 = vmatprep.subr.mxu0 0.0
    %1526 = vmatpush1.msra.mxu0 0.0
    %1527 = vmatprep.subr.mxu0 0.0
    %1528 = vmatpush1.msra.mxu0 0.0
    %1529 = vmatprep.subr.mxu0 0.0
    %1530 = vmatpush1.msra.mxu0 0.0
    %1531 = vmatprep.subr.mxu0 0.0
    %1532 = vmatpush1.msra.mxu0 0.0
    %1533 = vmatprep.subr.mxu0 0.0
    %1534 = vmatpush1.msra.mxu0 0.0
    %1535 = vmatprep.subr.mxu0 0.0
    %1536 = vmatpush1.msra.mxu0 0.0
    %1537 = vmatprep.subr.mxu0 0.0
    %1538 = vmatpush1.msra.mxu0 0.0
    %1539 = vmatprep.subr.mxu0 0.0
    %1540 = vmatpush1.msra.mxu0 0.0
    %1541 = vmatprep.subr.mxu0 0.0
    %1542 = vmatpush1.msra.mxu0 0.0
    %1543 = vmatprep.subr.mxu0 0.0
    %1544 = vmatpush1.msra.mxu0 0.0
    %1545 = vmatprep.subr.mxu0 0.0
    %1546 = vmatpush1.msra.mxu0 0.0
    %1547 = vmatprep.subr.mxu0 0.0
    %1548 = vmatpush1.msra.mxu0 0.0
    %1549 = vmatprep.subr.mxu0 0.0
    %1550 = vmatpush1.msra.mxu0 0.0
    %1551 = vmatprep.subr.mxu0 0.0
    %1552 = vmatpush1.msra.mxu0 0.0
    %1553 = vmatprep.subr.mxu0 0.0
    %1554 = vmatpush1.msra.mxu0 0.0
    %1555 = vmatprep.subr.mxu0 0.0
    %1556 = vmatpush1.msra.mxu0 0.0
    %1557 = vmatprep.subr.mxu0 0.0
    %1558 = vmatpush1.msra.mxu0 0.0
    %1559 = vmatprep.subr.mxu0 0.0
    %1560 = vmatpush1.msra.mxu0 0.0
    %1561 = vmatprep.subr.mxu0 0.0
    %1562 = vmatpush1.msra.mxu0 0.0
    %1563 = vmatprep.subr.mxu0 0.0
    %1564 = vmatpush1.msra.mxu0 0.0
    %1565 = vmatprep.mubr.f32.mxu0 0.0
    %1566 = vmatmul.mubr.f32.gmra.mrb[0].mxu0 %v1499
    %v1567 = vpop.f32.mrb[0].mxu0
    %v1568 = vadd.f32 %v253, %v1567
    %v1569 = vpop.f32.mrb[0].mxu0
    %1570 = vdwg.mxu0
    %v1571 = vmax.f32 %v1568, 0.0
    %v1573 = vrot.slane %v507, 6
    %v1576 = vrot.slane %v685, 4
    %v1579 = vrot.slane %v863, 2
    %v1582 = vrot.slane %v1215, 6
    %v1585 = vrot.slane %v1393, 4
    %v1588 = vrot.slane %v1571, 2
    %vm1590 = vcmask 1041408
    %v1591 = vsel %vm1590, %v329, %v1573
    %vm1592 = vcmask 1043456
    %v1593 = vsel %vm1592, %v1591, %v1576
    %vm1594 = vcmask 1045504
    %v1595 = vsel %vm1594, %v1593, %v1579
    %v1596 = vsel %vm1590, %v1037, %v1582
    %v1597 = vsel %vm1592, %v1596, %v1585
    %v1598 = vsel %vm1594, %v1597, %v1588
    %v1599 = vlaneseq
    %v1600 = vshrl.u32 %v1599, 7
    %v1601 = vsub.s32 0, %v1600
    %v1602 = vrot.slane %v56, %v1601
    %1603 = vmatprep.subr.mxu0 0.0
    %1604 = vmatpush1.msra.mxu0 %v40
    %1605 = vmatprep.subr.mxu0 0.0
    %1606 = vmatpush1.msra.mxu0 %v41
    %1607 = vmatprep.subr.mxu0 0.0
    %1608 = vmatpush1.msra.mxu0 %v42
    %1609 = vmatprep.subr.mxu0 0.0
    %1610 = vmatpush1.msra.mxu0 %v43
    %1611 = vmatprep.subr.mxu0 0.0
    %1612 = vmatpush1.msra.mxu0 %v44
    %1613 = vmatprep.subr.mxu0 0.0
    %1614 = vmatpush1.msra.mxu0 %v45
    %1615 = vmatprep.subr.mxu0 0.0
    %1616 = vmatpush1.msra.mxu0 %v46
    %1617 = vmatprep.subr.mxu0 0.0
    %1618 = vmatpush1.msra.mxu0 %v47
    %1619 = vmatprep.subr.mxu0 0.0
    %1620 = vmatpush1.msra.mxu0 %v48
    %1621 = vmatprep.subr.mxu0 0.0
    %1622 = vmatpush1.msra.mxu0 %v49
    %1623 = vmatprep.subr.mxu0 0.0
    %1624 = vmatpush1.msra.mxu0 %v50
    %1625 = vmatprep.subr.mxu0 0.0
    %1626 = vmatpush1.msra.mxu0 %v51
    %1627 = vmatprep.subr.mxu0 0.0
    %1628 = vmatpush1.msra.mxu0 %v52
    %1629 = vmatprep.subr.mxu0 0.0
    %1630 = vmatpush1.msra.mxu0 %v53
    %1631 = vmatprep.subr.mxu0 0.0
    %1632 = vmatpush1.msra.mxu0 %v54
    %1633 = vmatprep.subr.mxu0 0.0
    %1634 = vmatpush1.msra.mxu0 %v55
    %1635 = vmatprep.subr.mxu0 0.0
    %1636 = vmatpush1.msra.mxu0 0.0
    %1637 = vmatprep.subr.mxu0 0.0
    %1638 = vmatpush1.msra.mxu0 0.0
    %1639 = vmatprep.subr.mxu0 0.0
    %1640 = vmatpush1.msra.mxu0 0.0
    %1641 = vmatprep.subr.mxu0 0.0
    %1642 = vmatpush1.msra.mxu0 0.0
    %1643 = vmatprep.subr.mxu0 0.0
    %1644 = vmatpush1.msra.mxu0 0.0
    %1645 = vmatprep.subr.mxu0 0.0
    %1646 = vmatpush1.msra.mxu0 0.0
    %1647 = vmatprep.subr.mxu0 0.0
    %1648 = vmatpush1.msra.mxu0 0.0
    %1649 = vmatprep.subr.mxu0 0.0
    %1650 = vmatpush1.msra.mxu0 0.0
    %1651 = vmatprep.subr.mxu0 0.0
    %1652 = vmatpush1.msra.mxu0 0.0
    %1653 = vmatprep.subr.mxu0 0.0
    %1654 = vmatpush1.msra.mxu0 0.0
    %1655 = vmatprep.subr.mxu0 0.0
    %1656 = vmatpush1.msra.mxu0 0.0
    %1657 = vmatprep.subr.mxu0 0.0
    %1658 = vmatpush1.msra.mxu0 0.0
    %1659 = vmatprep.subr.mxu0 0.0
    %1660 = vmatpush1.msra.mxu0 0.0
    %1661 = vmatprep.subr.mxu0 0.0
    %1662 = vmatpush1.msra.mxu0 0.0
    %1663 = vmatprep.subr.mxu0 0.0
    %1664 = vmatpush1.msra.mxu0 0.0
    %1665 = vmatprep.subr.mxu0 0.0
    %1666 = vmatpush1.msra.mxu0 0.0
    %1667 = vmatprep.mubr.f32.mxu0 0.0
    %1668 = vmatmul.mubr.f32.gmra.mrb[0].mxu0 %v1595
    %v1669 = vpop.f32.mrb[0].mxu0
    %v1670 = vadd.f32 %v1602, %v1669
    %v1671 = vpop.f32.mrb[0].mxu0
    %1672 = vmatprep.mubr.f32.mxu0 0.0
    %1673 = vmatmul.mubr.f32.gmra.mrb[0].mxu0 %v1598
    %v1674 = vpop.f32.mrb[0].mxu0
    %v1675 = vadd.f32 %v1602, %v1674
    %v1676 = vpop.f32.mrb[0].mxu0
    %1677 = vdwg.mxu0
    %1678 = vst [vmem:[%s3] sm:$0xff] %v1670
    %1679 = vst [vmem:[%s3 + $0x8] sm:$0xff] %v1675
    %v1682 = vrot.slane %v1488, 4
    %1683 = vrot.lane.b32.xlu0 %v1682, 64
    %v1684 = vpop.permute.xlu0 %1683
    %v1686 = vsel %vm1590, %v1496, %v1684
    %1688 = vrot.lane.b32.xlu0 %v1686, 32
    %v1689 = vpop.permute.xlu0 %1688
    %v1691 = vsel %vm147, %v1689, 0.0
    %1692 = vst [vmem:[%s3 + $0x10] sm:$0xf] %v1691
    // Predicated region
    $region18: #{encoder_forward.1} parent=1 // pred_check
      _
    $region19: #{encoder_forward.1} parent=1 // pred_check_branch
      %1694 = sbr.rel (0) target = $region21
    $region20: #{encoder_forward.1} parent=1 // pred_region
      _
    $region21: #{encoder_forward.1} parent=1 // pred_fallthru
      _
    // Predicated region
    $region22: #{encoder_forward.1} parent=1 // pred_check
      _
    $region23: #{encoder_forward.1} parent=1 // pred_check_branch
      %1696 = sbr.rel (0) target = $region25
    $region24: #{encoder_forward.1} parent=1 // pred_region
      _
    $region25: #{encoder_forward.1} parent=1 // pred_fallthru
      _
    %1697 = vsyncpa [#allocation3], 1

</llo_original>
